<compile_context>
chip_gen: v7x
topology: tpu7x:2x2x1
jax: 0.10.0
libtpu: 0.0.40
codegen_flags: <defaults>
</compile_context>

<pallas_src>
import functools

import jax
import jax.numpy as jnp
from jax.experimental import pallas as pl
from jax.experimental.pallas import tpu as pltpu

_EPS = 1e-5                       # BatchNorm eps (PyTorch default)
_INV_SQRT2 = 0.7071067811865476
_SQRT_2_OVER_PI = 0.7978845608028654


# ------------------------------ shared math ---------------------------------
def _gelu_erf(x):
    # Exact erf GELU == nn.GELU() default.
    return 0.5 * x * (1.0 + jax.lax.erf(x * _INV_SQRT2))


def _gelu_tanh(x):
    # tanh-approx GELU (EUP-friendly on v5e); opt-in via approx_gelu=True.
    return 0.5 * x * (1.0 + jnp.tanh(_SQRT_2_OVER_PI * (x + 0.044715 * x * x * x)))


def _bn_cols(x, gamma, beta):
    """Train-mode BatchNorm over the rows of a 2-D (rows, channels) slab."""
    mean = jnp.mean(x, axis=0, keepdims=True)
    d = x - mean
    var = jnp.mean(d * d, axis=0, keepdims=True)
    return d * (gamma * jax.lax.rsqrt(var + _EPS)) + beta


def _bn_grouped_cols(x, C, gamma, beta):
    """Train-mode BatchNorm per emb channel e on a (rows, C*E) slab whose
    columns are grouped as (c, e): statistics reduce over rows AND the C
    column groups.  Group reduce / broadcast use static lane slices + concat
    (no in-kernel reshapes)."""
    rows = x.shape[0]
    E = x.shape[1] // C
    n = float(rows * C)

    def group_sum(v):                          # (1, C*E) -> (1, E)
        acc = v[:, 0:E]
        for c in range(1, C):
            acc = acc + v[:, c * E:(c + 1) * E]
        return acc

    def group_bcast(v):                        # (1, E) -> (1, C*E)
        return jnp.concatenate([v] * C, axis=1) if C > 1 else v

    mean = group_sum(jnp.sum(x, axis=0, keepdims=True)) / n
    d = x - group_bcast(mean)
    var = group_sum(jnp.sum(d * d, axis=0, keepdims=True)) / n
    return d * group_bcast(gamma * jax.lax.rsqrt(var + _EPS)) + group_bcast(beta)


# ------------------------------ Pallas kernel --------------------------------
def _encoder_head_kernel(xc_ref, w1_ref, w2_ref, w3_ref, vE_ref, vR_ref, wo_ref,
                         o_ref, *, B, C, approx_gelu):
    """One DisjoinEncoder (temporal -> spatial -> rep conv, each BN+GELU),
    AdaptiveAvgPool1d(1) and this encoder's half of the classifier head.

    xc_ref: (B*T1, C*K1) bf16  pre-im2col'd input (column index = c*K1 + k)
    w1_ref: (C*K1, C*E) bf16   I_C (x) w1 block-diagonal temporal weights
    w2_ref: (C*E, E)    bf16   spatial conv, contraction flattened as (c, e)
    w3_ref: (K3*E, R)   bf16   rep conv, contraction flattened as (k, e)
    vE_ref: (4, E)      f32    rows = [gamma1, beta1, gamma2, beta2]
    vR_ref: (2, R)      f32    rows = [gamma3, beta3]
    wo_ref: (R, NC)     bf16   this encoder's half of the C_out weight
    o_ref : (B, NC)     f32    partial logits  gap @ wo  (bias added outside)

    Conv biases are omitted: a per-channel constant is exactly cancelled by the
    train-mode BatchNorm mean subtraction.
    """
    rows = xc_ref.shape[0]           # B * T1
    CE, E = w2_ref.shape
    KE, R = w3_ref.shape
    K3 = KE // E
    T1 = rows // B
    T2 = T1 - K3 + 1
    gelu = _gelu_tanh if approx_gelu else _gelu_erf

    vE = vE_ref[...]
    vR = vR_ref[...]
    g1, be1, g2, be2 = vE[0:1], vE[1:2], vE[2:3], vE[3:4]
    g3, be3 = vR[0:1], vR[1:2]

    # --- temporal_CNN: Conv2d(1, E, [1, K1]) as ONE (B*T1, C*K1)@(C*K1, C*E)
    #     matmul; output is already in the layout the spatial matmul consumes.
    h1 = jnp.dot(xc_ref[...], w1_ref[...], preferred_element_type=jnp.float32)
    h1 = gelu(_bn_grouped_cols(h1, C, g1, be1))              # (B*T1, C*E) f32

    # --- spatial_CNN: Conv2d(E, E, [C, 1]) as one (B*T1, C*E)@(C*E, E) matmul.
    h2 = jnp.dot(h1.astype(jnp.bfloat16), w2_ref[...],
                 preferred_element_type=jnp.float32)
    h2 = gelu(_bn_cols(h2, g2, be2))                          # (B*T1, E) f32

    # --- rep_CNN: Conv1d(E, R, K3) as one (B*T2, K3*E)@(K3*E, R) matmul.
    h2 = h2.astype(jnp.bfloat16).reshape(B, T1, E)
    taps = jnp.concatenate([h2[:, k:k + T2, :] for k in range(K3)], axis=-1)
    h3 = jnp.dot(taps.reshape(B * T2, K3 * E), w3_ref[...],
                 preferred_element_type=jnp.float32)
    h3 = gelu(_bn_cols(h3, g3, be3))                          # (B*T2, R) f32

    # --- gap (mean over time) + this encoder's half of C_out.
    g = jnp.mean(h3.reshape(B, T2, R), axis=1)                # (B, R)
    o_ref[...] = jnp.dot(g.astype(jnp.bfloat16), wo_ref[...],
                         preferred_element_type=jnp.float32)


# ------------------------------ wrapper ---------------------------------------
def _pack_encoder_params(p, C):
    """Pack one encoder's params into the kernel layouts (weights only)."""
    K1, E = p["w1"].shape
    K3, _, R = p["w3"].shape
    eye = jnp.eye(C, dtype=p["w1"].dtype)
    # block-diagonal I_C (x) w1 : row index c*K1+k, col index c'*E+e
    w1b = (eye[:, None, :, None] * p["w1"][None, :, None, :]).reshape(C * K1, C * E)
    w2f = p["w2"].reshape(C * E, E)
    w3f = p["w3"].reshape(K3 * E, R)
    vE = jnp.stack([p["g1"], p["be1"], p["g2"], p["be2"]], axis=0)   # (4, E)
    vR = jnp.stack([p["g3"], p["be3"]], axis=0)                      # (2, R)
    return w1b, w2f, w3f, vE, vR


def series2vec_forward(x, p_t, p_f, w_out, b_out, *,
                       core_parallel=False, approx_gelu=False, vmem_limit_mb=64):
    B, C, L = x.shape
    K1, E = p_t["w1"].shape
    K3, _, R = p_t["w3"].shape
    NC = w_out.shape[1]
    T1 = L - K1 + 1

    # TODO(synk): torch.fft.fft has no Pallas equivalent; the real part of the
    # FFT (== torch's complex->float cast) is computed in plain JAX glue.
    x_f = jnp.real(jnp.fft.fft(x, axis=-1)).astype(jnp.float32)

    # Wrapper-side im2col (layout plumbing): the kernel input is already the
    # (B*T1, C*K1) slab the temporal matmul consumes; bf16 halves DMA bytes.
    def im2col(z):                                   # (B, C, L) -> (B*T1, C*K1)
        cols = jnp.stack([z[:, :, k:k + T1] for k in range(K1)], axis=-1)
        return cols.transpose(0, 2, 1, 3).reshape(B * T1, C * K1)

    xc = jnp.stack([im2col(x), im2col(x_f)], axis=0).astype(jnp.bfloat16)

    pk_t = _pack_encoder_params(p_t, C)
    pk_f = _pack_encoder_params(p_f, C)
    w1s = jnp.stack([pk_t[0], pk_f[0]]).astype(jnp.bfloat16)   # (2, C*K1, C*E)
    w2s = jnp.stack([pk_t[1], pk_f[1]]).astype(jnp.bfloat16)   # (2, C*E, E)
    w3s = jnp.stack([pk_t[2], pk_f[2]]).astype(jnp.bfloat16)   # (2, K3*E, R)
    vEs = jnp.stack([pk_t[3], pk_f[3]])                        # (2, 4, E) f32
    vRs = jnp.stack([pk_t[4], pk_f[4]])                        # (2, 2, R) f32
    wos = jnp.stack([w_out[:R], w_out[R:]]).astype(jnp.bfloat16)  # (2, R, NC)

    kernel = functools.partial(_encoder_head_kernel, B=B, C=C,
                               approx_gelu=approx_gelu)
    sem = pltpu.CORE_PARALLEL if core_parallel else "parallel"

    parts = pl.pallas_call(
        kernel,
        out_shape=jax.ShapeDtypeStruct((2, B, NC), jnp.float32),
        grid=(2,),
        in_specs=[
            pl.BlockSpec((None, B * T1, C * K1), lambda e: (e, 0, 0)),
            pl.BlockSpec((None, C * K1, C * E), lambda e: (e, 0, 0)),
            pl.BlockSpec((None, C * E, E), lambda e: (e, 0, 0)),
            pl.BlockSpec((None, K3 * E, R), lambda e: (e, 0, 0)),
            pl.BlockSpec((None, 4, E), lambda e: (e, 0, 0)),
            pl.BlockSpec((None, 2, R), lambda e: (e, 0, 0)),
            pl.BlockSpec((None, R, NC), lambda e: (e, 0, 0)),
        ],
        out_specs=pl.BlockSpec((None, B, NC), lambda e: (e, 0, 0)),
        compiler_params=pltpu.CompilerParams(
            dimension_semantics=(sem,),
            vmem_limit_bytes=vmem_limit_mb * 1024 * 1024,
        ),
    )(xc, w1s, w2s, w3s, vEs, vRs, wos)

    # Sum the two per-encoder partial head contributions + bias (wrapper glue).
    return parts[0] + parts[1] + b_out


# ------------------------------ pure-JAX reference ---------------------------
def _bn_ref(x, axes, gamma, beta):
    mean = jnp.mean(x, axis=axes, keepdims=True)
    var = jnp.mean((x - mean) ** 2, axis=axes, keepdims=True)
    return (x - mean) * jax.lax.rsqrt(var + _EPS) * gamma + beta


def _encoder_ref(x, p):
    B, C, L = x.shape
    K1, E = p["w1"].shape
    K3, _, R = p["w3"].shape
    T1 = L - K1 + 1
    T2 = T1 - K3 + 1
    patches = jnp.stack([x[:, :, k:k + T1] for k in range(K1)], axis=-1)  # (B,C,T1,K1)
    h1 = jnp.einsum("bctk,ke->bcte", patches, p["w1"]) + p["b1"]
    h1 = _gelu_erf(_bn_ref(h1, (0, 1, 2), p["g1"], p["be1"]))
    h2 = jnp.einsum("bcte,cef->btf", h1, p["w2"]) + p["b2"]
    h2 = _gelu_erf(_bn_ref(h2, (0, 1), p["g2"], p["be2"]))
    h3 = sum(jnp.einsum("bte,er->btr", h2[:, k:k + T2], p["w3"][k])
             for k in range(K3)) + p["b3"]
    h3 = _gelu_erf(_bn_ref(h3, (0, 1), p["g3"], p["be3"]))
    return jnp.mean(h3, axis=1)


def forward_ref(x, p_t, p_f, w_out, b_out):
    a = _encoder_ref(x, p_t)
    x_f = jnp.real(jnp.fft.fft(x, axis=-1)).astype(jnp.float32)
    b = _encoder_ref(x_f, p_f)
    return jnp.concatenate([a, b], axis=1) @ w_out + b_out


# ------------------------------ params ---------------------------------------
def init_encoder_params(key, C, E, R, K1=8, K3=3):
    ks = jax.random.split(key, 4)
    gain = 2.0 ** 0.5  # calculate_gain('relu')

    def xavier(k, shape, fan_in, fan_out):
        a = gain * (6.0 / (fan_in + fan_out)) ** 0.5
        return jax.random.uniform(k, shape, jnp.float32, -a, a)

    # torch temporal weight (E,1,1,K1)  -> layout (K1, E)
    w1 = xavier(ks[0], (K1, E), fan_in=1 * K1, fan_out=E * K1)
    # torch spatial weight (E,E,C,1)    -> layout (C, E_in, E_out)
    w2 = xavier(ks[1], (C, E, E), fan_in=E * C, fan_out=E * C)
    # torch rep weight (R,E,K3) default init -> layout (K3, E, R)
    bound = 1.0 / (E * K3) ** 0.5
    w3 = jax.random.uniform(ks[2], (K3, E, R), jnp.float32, -bound, bound)
    b3 = jax.random.uniform(ks[3], (R,), jnp.float32, -bound, bound)

    z_e = jnp.zeros((E,), jnp.float32)
    o_e = jnp.ones((E,), jnp.float32)
    return dict(
        w1=w1, b1=z_e, g1=o_e, be1=z_e,
        w2=w2, b2=z_e, g2=o_e, be2=z_e,
        w3=w3, b3=b3,
        g3=jnp.ones((R,), jnp.float32), be3=jnp.zeros((R,), jnp.float32),
    )


if __name__ == "__main__":
    key = jax.random.PRNGKey(0)
    # config: Data_shape = (B, C, L), emb_size=16, rep_size=16, kernel_size=8
    B, C, L = 2, 4, 16
    E, R, NUM_CLASSES = 16, 16, 5

    k_x, k_t, k_f, k_w, k_b = jax.random.split(key, 5)
    x = jax.random.normal(k_x, (B, C, L), jnp.float32)
    p_t = init_encoder_params(k_t, C, E, R)
    p_f = init_encoder_params(k_f, C, E, R)
    bound = 1.0 / (2.0 * R) ** 0.5
    w_out = jax.random.uniform(k_w, (2 * R, NUM_CLASSES), jnp.float32, -bound, bound)
    b_out = jax.random.uniform(k_b, (1, NUM_CLASSES), jnp.float32, -bound, bound)

    kind = jax.devices()[0].device_kind.lower()
    want_core_parallel = "v7" in kind        # only v7x has 2 TensorCores / chip
    vmem_mb = 48 if "v7" in kind else 64     # v7x VMEM is 64 MiB; v5e/v6e: 128

    fwd = jax.jit(series2vec_forward,
                  static_argnames=("core_parallel", "approx_gelu", "vmem_limit_mb"))
    try:
        out = jax.block_until_ready(
            fwd(x, p_t, p_f, w_out, b_out,
                core_parallel=want_core_parallel, vmem_limit_mb=vmem_mb))
    except Exception:
        # CORE_PARALLEL unsupported on this chip/runtime -> plain parallel grid.
        out = jax.block_until_ready(
            fwd(x, p_t, p_f, w_out, b_out,
                core_parallel=False, vmem_limit_mb=vmem_mb))

    ref = forward_ref(x, p_t, p_f, w_out, b_out)
    assert out.shape == (B, NUM_CLASSES), out.shape
    # Kernel uses bf16 matmul operands (f32 accumulation); reference is pure f32.
    assert jnp.allclose(out, ref, rtol=2e-2, atol=2e-2), (out, ref)
    print("KERNEL_OK")
</pallas_src>

<mosaic_0001>
module attributes {stable_mosaic.version = 11 : i64} {
  func.func @_encoder_head_kernel(%arg0: i32, %arg1: memref<1x18x32xbf16, #tpu.memory_space<vmem>>, %arg2: memref<1x32x64xbf16, #tpu.memory_space<vmem>>, %arg3: memref<1x64x16xbf16, #tpu.memory_space<vmem>>, %arg4: memref<1x48x16xbf16, #tpu.memory_space<vmem>>, %arg5: memref<1x4x16xf32, #tpu.memory_space<vmem>>, %arg6: memref<1x2x16xf32, #tpu.memory_space<vmem>>, %arg7: memref<1x16x5xbf16, #tpu.memory_space<vmem>>, %arg8: memref<1x2x5xf32, #tpu.memory_space<vmem>>) attributes {dimension_semantics = [#tpu.dimension_semantics<parallel>], iteration_bounds = array<i64: 2>, scalar_prefetch = 0 : i64, scratch_operands = 0 : i64, tpu.core_type = #tpu.core_type<tc>, window_params = [{transform_indices = @transform_0, window_bounds = array<i64: 1, 18, 32>}, {transform_indices = @transform_1, window_bounds = array<i64: 1, 32, 64>}, {transform_indices = @transform_2, window_bounds = array<i64: 1, 64, 16>}, {transform_indices = @transform_3, window_bounds = array<i64: 1, 48, 16>}, {transform_indices = @transform_4, window_bounds = array<i64: 1, 4, 16>}, {transform_indices = @transform_5, window_bounds = array<i64: 1, 2, 16>}, {transform_indices = @transform_6, window_bounds = array<i64: 1, 16, 5>}, {transform_indices = @transform_7, window_bounds = array<i64: 1, 2, 5>}]} {
    %c0 = arith.constant 0 : index
    %c0_0 = arith.constant 0 : index
    %c0_1 = arith.constant 0 : index
    %0 = vector.load %arg5[%c0, %c0_0, %c0_1] : memref<1x4x16xf32, #tpu.memory_space<vmem>>, vector<1x4x16xf32>
    %1 = vector.shape_cast %0 : vector<1x4x16xf32> to vector<4x16xf32>
    %c0_2 = arith.constant 0 : index
    %c0_3 = arith.constant 0 : index
    %c0_4 = arith.constant 0 : index
    %2 = vector.load %arg6[%c0_2, %c0_3, %c0_4] : memref<1x2x16xf32, #tpu.memory_space<vmem>>, vector<1x2x16xf32>
    %3 = vector.shape_cast %2 : vector<1x2x16xf32> to vector<2x16xf32>
    %4 = vector.extract_strided_slice %1 {offsets = [0, 0], sizes = [1, 16], strides = [1, 1]} : vector<4x16xf32> to vector<1x16xf32>
    %5 = vector.extract_strided_slice %1 {offsets = [1, 0], sizes = [1, 16], strides = [1, 1]} : vector<4x16xf32> to vector<1x16xf32>
    %6 = vector.extract_strided_slice %1 {offsets = [2, 0], sizes = [1, 16], strides = [1, 1]} : vector<4x16xf32> to vector<1x16xf32>
    %7 = vector.extract_strided_slice %1 {offsets = [3, 0], sizes = [1, 16], strides = [1, 1]} : vector<4x16xf32> to vector<1x16xf32>
    %8 = vector.extract_strided_slice %3 {offsets = [0, 0], sizes = [1, 16], strides = [1, 1]} : vector<2x16xf32> to vector<1x16xf32>
    %9 = vector.extract_strided_slice %3 {offsets = [1, 0], sizes = [1, 16], strides = [1, 1]} : vector<2x16xf32> to vector<1x16xf32>
    %c0_5 = arith.constant 0 : index
    %c0_6 = arith.constant 0 : index
    %c0_7 = arith.constant 0 : index
    %10 = vector.load %arg1[%c0_5, %c0_6, %c0_7] : memref<1x18x32xbf16, #tpu.memory_space<vmem>>, vector<1x18x32xbf16>
    %11 = vector.shape_cast %10 : vector<1x18x32xbf16> to vector<18x32xbf16>
    %c0_8 = arith.constant 0 : index
    %c0_9 = arith.constant 0 : index
    %c0_10 = arith.constant 0 : index
    %12 = vector.load %arg2[%c0_8, %c0_9, %c0_10] : memref<1x32x64xbf16, #tpu.memory_space<vmem>>, vector<1x32x64xbf16>
    %13 = vector.shape_cast %12 : vector<1x32x64xbf16> to vector<32x64xbf16>
    %cst = arith.constant dense<0.000000e+00> : vector<18x64xf32>
    %14 = tpu.matmul %11, %13, %cst {dimension_numbers = #tpu.dot_dimension_numbers<[1], [0], [0], [1], [0, 0, 1, 1], [], []>} : vector<18x32xbf16>, vector<32x64xbf16>, vector<18x64xf32> -> vector<18x64xf32>
    %cst_11 = arith.constant dense<0.000000e+00> : vector<64xf32>
    %15 = vector.multi_reduction <add>, %14, %cst_11 [0] : vector<18x64xf32> to vector<64xf32>
    %16 = vector.shape_cast %15 : vector<64xf32> to vector<1x64xf32>
    %17 = vector.extract_strided_slice %16 {offsets = [0, 0], sizes = [1, 16], strides = [1, 1]} : vector<1x64xf32> to vector<1x16xf32>
    %18 = vector.extract_strided_slice %16 {offsets = [0, 16], sizes = [1, 16], strides = [1, 1]} : vector<1x64xf32> to vector<1x16xf32>
    %19 = arith.addf %17, %18 : vector<1x16xf32>
    %20 = vector.extract_strided_slice %16 {offsets = [0, 32], sizes = [1, 16], strides = [1, 1]} : vector<1x64xf32> to vector<1x16xf32>
    %21 = arith.addf %19, %20 : vector<1x16xf32>
    %22 = vector.extract_strided_slice %16 {offsets = [0, 48], sizes = [1, 16], strides = [1, 1]} : vector<1x64xf32> to vector<1x16xf32>
    %23 = arith.addf %21, %22 : vector<1x16xf32>
    %cst_12 = arith.constant 7.200000e+01 : f32
    %24 = vector.broadcast %cst_12 : f32 to vector<1x16xf32>
    %25 = arith.divf %23, %24 : vector<1x16xf32>
    %26 = tpu.concatenate %25, %25, %25, %25 in 1 : vector<1x16xf32>, vector<1x16xf32>, vector<1x16xf32>, vector<1x16xf32> -> vector<1x64xf32>
    %27 = vector.broadcast %26 : vector<1x64xf32> to vector<18x64xf32>
    %28 = arith.subf %14, %27 : vector<18x64xf32>
    %29 = arith.mulf %28, %28 : vector<18x64xf32>
    %cst_13 = arith.constant dense<0.000000e+00> : vector<64xf32>
    %30 = vector.multi_reduction <add>, %29, %cst_13 [0] : vector<18x64xf32> to vector<64xf32>
    %31 = vector.shape_cast %30 : vector<64xf32> to vector<1x64xf32>
    %32 = vector.extract_strided_slice %31 {offsets = [0, 0], sizes = [1, 16], strides = [1, 1]} : vector<1x64xf32> to vector<1x16xf32>
    %33 = vector.extract_strided_slice %31 {offsets = [0, 16], sizes = [1, 16], strides = [1, 1]} : vector<1x64xf32> to vector<1x16xf32>
    %34 = arith.addf %32, %33 : vector<1x16xf32>
    %35 = vector.extract_strided_slice %31 {offsets = [0, 32], sizes = [1, 16], strides = [1, 1]} : vector<1x64xf32> to vector<1x16xf32>
    %36 = arith.addf %34, %35 : vector<1x16xf32>
    %37 = vector.extract_strided_slice %31 {offsets = [0, 48], sizes = [1, 16], strides = [1, 1]} : vector<1x64xf32> to vector<1x16xf32>
    %38 = arith.addf %36, %37 : vector<1x16xf32>
    %cst_14 = arith.constant 7.200000e+01 : f32
    %39 = vector.broadcast %cst_14 : f32 to vector<1x16xf32>
    %40 = arith.divf %38, %39 : vector<1x16xf32>
    %cst_15 = arith.constant 9.99999974E-6 : f32
    %41 = vector.broadcast %cst_15 : f32 to vector<1x16xf32>
    %42 = arith.addf %40, %41 : vector<1x16xf32>
    %43 = math.rsqrt %42 : vector<1x16xf32>
    %44 = arith.mulf %4, %43 : vector<1x16xf32>
    %45 = tpu.concatenate %44, %44, %44, %44 in 1 : vector<1x16xf32>, vector<1x16xf32>, vector<1x16xf32>, vector<1x16xf32> -> vector<1x64xf32>
    %46 = vector.broadcast %45 : vector<1x64xf32> to vector<18x64xf32>
    %47 = arith.mulf %28, %46 : vector<18x64xf32>
    %48 = tpu.concatenate %5, %5, %5, %5 in 1 : vector<1x16xf32>, vector<1x16xf32>, vector<1x16xf32>, vector<1x16xf32> -> vector<1x64xf32>
    %49 = vector.broadcast %48 : vector<1x64xf32> to vector<18x64xf32>
    %50 = arith.addf %47, %49 : vector<18x64xf32>
    %cst_16 = arith.constant 5.000000e-01 : f32
    %51 = vector.broadcast %cst_16 : f32 to vector<18x64xf32>
    %52 = arith.mulf %51, %50 : vector<18x64xf32>
    %cst_17 = arith.constant 0.707106769 : f32
    %53 = vector.broadcast %cst_17 : f32 to vector<18x64xf32>
    %54 = arith.mulf %50, %53 : vector<18x64xf32>
    %55 = math.erf %54 : vector<18x64xf32>
    %cst_18 = arith.constant 1.000000e+00 : f32
    %56 = vector.broadcast %cst_18 : f32 to vector<18x64xf32>
    %57 = arith.addf %56, %55 : vector<18x64xf32>
    %58 = arith.mulf %52, %57 : vector<18x64xf32>
    %59 = arith.truncf %58 : vector<18x64xf32> to vector<18x64xbf16>
    %c0_19 = arith.constant 0 : index
    %c0_20 = arith.constant 0 : index
    %c0_21 = arith.constant 0 : index
    %60 = vector.load %arg3[%c0_19, %c0_20, %c0_21] : memref<1x64x16xbf16, #tpu.memory_space<vmem>>, vector<1x64x16xbf16>
    %61 = vector.shape_cast %60 : vector<1x64x16xbf16> to vector<64x16xbf16>
    %cst_22 = arith.constant dense<0.000000e+00> : vector<18x16xf32>
    %62 = tpu.matmul %59, %61, %cst_22 {dimension_numbers = #tpu.dot_dimension_numbers<[1], [0], [0], [1], [0, 0, 1, 1], [], []>} : vector<18x64xbf16>, vector<64x16xbf16>, vector<18x16xf32> -> vector<18x16xf32>
    %cst_23 = arith.constant dense<0.000000e+00> : vector<16xf32>
    %63 = vector.multi_reduction <add>, %62, %cst_23 [0] : vector<18x16xf32> to vector<16xf32>
    %64 = vector.shape_cast %63 : vector<16xf32> to vector<1x16xf32>
    %cst_24 = arith.constant 1.800000e+01 : f32
    %65 = vector.broadcast %cst_24 : f32 to vector<1x16xf32>
    %66 = arith.divf %64, %65 : vector<1x16xf32>
    %67 = vector.broadcast %66 : vector<1x16xf32> to vector<18x16xf32>
    %68 = arith.subf %62, %67 : vector<18x16xf32>
    %69 = arith.mulf %68, %68 : vector<18x16xf32>
    %cst_25 = arith.constant dense<0.000000e+00> : vector<16xf32>
    %70 = vector.multi_reduction <add>, %69, %cst_25 [0] : vector<18x16xf32> to vector<16xf32>
    %71 = vector.shape_cast %70 : vector<16xf32> to vector<1x16xf32>
    %cst_26 = arith.constant 1.800000e+01 : f32
    %72 = vector.broadcast %cst_26 : f32 to vector<1x16xf32>
    %73 = arith.divf %71, %72 : vector<1x16xf32>
    %cst_27 = arith.constant 9.99999974E-6 : f32
    %74 = vector.broadcast %cst_27 : f32 to vector<1x16xf32>
    %75 = arith.addf %73, %74 : vector<1x16xf32>
    %76 = math.rsqrt %75 : vector<1x16xf32>
    %77 = arith.mulf %6, %76 : vector<1x16xf32>
    %78 = vector.broadcast %77 : vector<1x16xf32> to vector<18x16xf32>
    %79 = arith.mulf %68, %78 : vector<18x16xf32>
    %80 = vector.broadcast %7 : vector<1x16xf32> to vector<18x16xf32>
    %81 = arith.addf %79, %80 : vector<18x16xf32>
    %cst_28 = arith.constant 5.000000e-01 : f32
    %82 = vector.broadcast %cst_28 : f32 to vector<18x16xf32>
    %83 = arith.mulf %82, %81 : vector<18x16xf32>
    %cst_29 = arith.constant 0.707106769 : f32
    %84 = vector.broadcast %cst_29 : f32 to vector<18x16xf32>
    %85 = arith.mulf %81, %84 : vector<18x16xf32>
    %86 = math.erf %85 : vector<18x16xf32>
    %cst_30 = arith.constant 1.000000e+00 : f32
    %87 = vector.broadcast %cst_30 : f32 to vector<18x16xf32>
    %88 = arith.addf %87, %86 : vector<18x16xf32>
    %89 = arith.mulf %83, %88 : vector<18x16xf32>
    %90 = arith.truncf %89 : vector<18x16xf32> to vector<18x16xbf16>
    %91 = vector.shape_cast %90 : vector<18x16xbf16> to vector<2x9x16xbf16>
    %92 = vector.extract_strided_slice %91 {offsets = [0, 0, 0], sizes = [2, 7, 16], strides = [1, 1, 1]} : vector<2x9x16xbf16> to vector<2x7x16xbf16>
    %93 = vector.extract_strided_slice %91 {offsets = [0, 1, 0], sizes = [2, 7, 16], strides = [1, 1, 1]} : vector<2x9x16xbf16> to vector<2x7x16xbf16>
    %94 = vector.extract_strided_slice %91 {offsets = [0, 2, 0], sizes = [2, 7, 16], strides = [1, 1, 1]} : vector<2x9x16xbf16> to vector<2x7x16xbf16>
    %95 = tpu.concatenate %92, %93, %94 in 2 : vector<2x7x16xbf16>, vector<2x7x16xbf16>, vector<2x7x16xbf16> -> vector<2x7x48xbf16>
    %96 = vector.shape_cast %95 : vector<2x7x48xbf16> to vector<14x48xbf16>
    %c0_31 = arith.constant 0 : index
    %c0_32 = arith.constant 0 : index
    %c0_33 = arith.constant 0 : index
    %97 = vector.load %arg4[%c0_31, %c0_32, %c0_33] : memref<1x48x16xbf16, #tpu.memory_space<vmem>>, vector<1x48x16xbf16>
    %98 = vector.shape_cast %97 : vector<1x48x16xbf16> to vector<48x16xbf16>
    %cst_34 = arith.constant dense<0.000000e+00> : vector<14x16xf32>
    %99 = tpu.matmul %96, %98, %cst_34 {dimension_numbers = #tpu.dot_dimension_numbers<[1], [0], [0], [1], [0, 0, 1, 1], [], []>} : vector<14x48xbf16>, vector<48x16xbf16>, vector<14x16xf32> -> vector<14x16xf32>
    %cst_35 = arith.constant dense<0.000000e+00> : vector<16xf32>
    %100 = vector.multi_reduction <add>, %99, %cst_35 [0] : vector<14x16xf32> to vector<16xf32>
    %101 = vector.shape_cast %100 : vector<16xf32> to vector<1x16xf32>
    %cst_36 = arith.constant 1.400000e+01 : f32
    %102 = vector.broadcast %cst_36 : f32 to vector<1x16xf32>
    %103 = arith.divf %101, %102 : vector<1x16xf32>
    %104 = vector.broadcast %103 : vector<1x16xf32> to vector<14x16xf32>
    %105 = arith.subf %99, %104 : vector<14x16xf32>
    %106 = arith.mulf %105, %105 : vector<14x16xf32>
    %cst_37 = arith.constant dense<0.000000e+00> : vector<16xf32>
    %107 = vector.multi_reduction <add>, %106, %cst_37 [0] : vector<14x16xf32> to vector<16xf32>
    %108 = vector.shape_cast %107 : vector<16xf32> to vector<1x16xf32>
    %cst_38 = arith.constant 1.400000e+01 : f32
    %109 = vector.broadcast %cst_38 : f32 to vector<1x16xf32>
    %110 = arith.divf %108, %109 : vector<1x16xf32>
    %cst_39 = arith.constant 9.99999974E-6 : f32
    %111 = vector.broadcast %cst_39 : f32 to vector<1x16xf32>
    %112 = arith.addf %110, %111 : vector<1x16xf32>
    %113 = math.rsqrt %112 : vector<1x16xf32>
    %114 = arith.mulf %8, %113 : vector<1x16xf32>
    %115 = vector.broadcast %114 : vector<1x16xf32> to vector<14x16xf32>
    %116 = arith.mulf %105, %115 : vector<14x16xf32>
    %117 = vector.broadcast %9 : vector<1x16xf32> to vector<14x16xf32>
    %118 = arith.addf %116, %117 : vector<14x16xf32>
    %cst_40 = arith.constant 5.000000e-01 : f32
    %119 = vector.broadcast %cst_40 : f32 to vector<14x16xf32>
    %120 = arith.mulf %119, %118 : vector<14x16xf32>
    %cst_41 = arith.constant 0.707106769 : f32
    %121 = vector.broadcast %cst_41 : f32 to vector<14x16xf32>
    %122 = arith.mulf %118, %121 : vector<14x16xf32>
    %123 = math.erf %122 : vector<14x16xf32>
    %cst_42 = arith.constant 1.000000e+00 : f32
    %124 = vector.broadcast %cst_42 : f32 to vector<14x16xf32>
    %125 = arith.addf %124, %123 : vector<14x16xf32>
    %126 = arith.mulf %120, %125 : vector<14x16xf32>
    %127 = vector.shape_cast %126 : vector<14x16xf32> to vector<2x7x16xf32>
    %cst_43 = arith.constant dense<0.000000e+00> : vector<2x16xf32>
    %128 = vector.multi_reduction <add>, %127, %cst_43 [1] : vector<2x7x16xf32> to vector<2x16xf32>
    %cst_44 = arith.constant 7.000000e+00 : f32
    %129 = vector.broadcast %cst_44 : f32 to vector<2x16xf32>
    %130 = arith.divf %128, %129 : vector<2x16xf32>
    %131 = arith.truncf %130 : vector<2x16xf32> to vector<2x16xbf16>
    %c0_45 = arith.constant 0 : index
    %c0_46 = arith.constant 0 : index
    %c0_47 = arith.constant 0 : index
    %132 = vector.load %arg7[%c0_45, %c0_46, %c0_47] : memref<1x16x5xbf16, #tpu.memory_space<vmem>>, vector<1x16x5xbf16>
    %133 = vector.shape_cast %132 : vector<1x16x5xbf16> to vector<16x5xbf16>
    %cst_48 = arith.constant dense<0.000000e+00> : vector<2x5xf32>
    %134 = tpu.matmul %131, %133, %cst_48 {dimension_numbers = #tpu.dot_dimension_numbers<[1], [0], [0], [1], [0, 0, 1, 1], [], []>} : vector<2x16xbf16>, vector<16x5xbf16>, vector<2x5xf32> -> vector<2x5xf32>
    %c0_49 = arith.constant 0 : index
    %c0_50 = arith.constant 0 : index
    %c0_51 = arith.constant 0 : index
    %135 = vector.load %arg8[%c0_49, %c0_50, %c0_51] : memref<1x2x5xf32, #tpu.memory_space<vmem>>, vector<1x2x5xf32>
    %136 = vector.shape_cast %135 : vector<1x2x5xf32> to vector<2x5xf32>
    %137 = vector.shape_cast %134 : vector<2x5xf32> to vector<1x2x5xf32>
    tpu.vector_store %arg8[%c0_49, %c0_50, %c0_51], %137 {strides = array<i32>} : memref<1x2x5xf32, #tpu.memory_space<vmem>>, vector<1x2x5xf32>,
    return
  }
  func.func @transform_0(%arg0: i32) -> (i32, i32, i32) {
    %c0_i32 = arith.constant 0 : i32
    %c0_i32_0 = arith.constant 0 : i32
    %c0_i32_1 = arith.constant 0 : i32
    return %arg0, %c0_i32, %c0_i32_0 : i32, i32, i32
  }
  func.func @transform_1(%arg0: i32) -> (i32, i32, i32) {
    %c0_i32 = arith.constant 0 : i32
    %c0_i32_0 = arith.constant 0 : i32
    %c0_i32_1 = arith.constant 0 : i32
    return %arg0, %c0_i32, %c0_i32_0 : i32, i32, i32
  }
  func.func @transform_2(%arg0: i32) -> (i32, i32, i32) {
    %c0_i32 = arith.constant 0 : i32
    %c0_i32_0 = arith.constant 0 : i32
    %c0_i32_1 = arith.constant 0 : i32
    return %arg0, %c0_i32, %c0_i32_0 : i32, i32, i32
  }
  func.func @transform_3(%arg0: i32) -> (i32, i32, i32) {
    %c0_i32 = arith.constant 0 : i32
    %c0_i32_0 = arith.constant 0 : i32
    %c0_i32_1 = arith.constant 0 : i32
    return %arg0, %c0_i32, %c0_i32_0 : i32, i32, i32
  }
  func.func @transform_4(%arg0: i32) -> (i32, i32, i32) {
    %c0_i32 = arith.constant 0 : i32
    %c0_i32_0 = arith.constant 0 : i32
    %c0_i32_1 = arith.constant 0 : i32
    return %arg0, %c0_i32, %c0_i32_0 : i32, i32, i32
  }
  func.func @transform_5(%arg0: i32) -> (i32, i32, i32) {
    %c0_i32 = arith.constant 0 : i32
    %c0_i32_0 = arith.constant 0 : i32
    %c0_i32_1 = arith.constant 0 : i32
    return %arg0, %c0_i32, %c0_i32_0 : i32, i32, i32
  }
  func.func @transform_6(%arg0: i32) -> (i32, i32, i32) {
    %c0_i32 = arith.constant 0 : i32
    %c0_i32_0 = arith.constant 0 : i32
    %c0_i32_1 = arith.constant 0 : i32
    return %arg0, %c0_i32, %c0_i32_0 : i32, i32, i32
  }
  func.func @transform_7(%arg0: i32) -> (i32, i32, i32) {
    %c0_i32 = arith.constant 0 : i32
    %c0_i32_0 = arith.constant 0 : i32
    %c0_i32_1 = arith.constant 0 : i32
    return %arg0, %c0_i32, %c0_i32_0 : i32, i32, i32
  }
}

</mosaic_0001>

<llo_original>
// kernel: series2vec_forward.1
$region0: #{series2vec_forward.1}
  #allocation0 [shape = 'u32[]', space=smem, size = 0x4, offset = 0x4, fixed_abs, tag = 'smem constant byte address 0x4 - core index']
  #allocation1 [shape = 'u32[144,128]{1,0:T(1,128)}', space=vmem, size = 0x12000, scoped, tag = 'internal scratch']
  %s0 = inlined_call_operand.hbm [shape: bf16[2,18,32], index: 0, kind: input, shape index: {}]
  %s1 = inlined_call_operand.hbm [shape: bf16[2,32,64], index: 1, kind: input, shape index: {}]
  %s2 = inlined_call_operand.hbm [shape: bf16[2,64,16], index: 2, kind: input, shape index: {}]
  %s3 = inlined_call_operand.hbm [shape: bf16[2,48,16], index: 3, kind: input, shape index: {}]
  %s4 = inlined_call_operand.hbm [shape: f32[2,4,16], index: 4, kind: input, shape index: {}]
  %s5 = inlined_call_operand.hbm [shape: f32[2,2,16], index: 5, kind: input, shape index: {}]
  %s6 = inlined_call_operand.hbm [shape: bf16[2,16,5], index: 6, kind: input, shape index: {}]
  %s7 = inlined_call_operand.hbm [shape: f32[2,2,5], index: 7, kind: output, shape index: {}]
  %s8 = sld [smem:[#allocation0]]
  $region89: #{series2vec_forward.1} parent=0
    _
  %s10 = ssub.s32 1, %s8
  %s11 = scalar_select 0, %s10, %s8
  $region1: #{series2vec_forward.1} parent=0
    #allocation2 [shape = 'u8[12288]{0}', space=vmem, size = 0x3000, scoped, tag = 'input window, operand 0']
    #allocation3 [shape = 's32[2]{0}', space=sflag, size = 0x8, scoped, tag = 'scoped memory for series2vec_forward.1']
    #allocation4 [shape = 's32[2]{0}', space=sflag, size = 0x8, scoped, tag = 'scoped memory for series2vec_forward.1']
    #allocation5 [shape = 'u8[16384]{0}', space=vmem, size = 0x4000, scoped, tag = 'input window, operand 1']
    #allocation6 [shape = 's32[2]{0}', space=sflag, size = 0x8, scoped, tag = 'scoped memory for series2vec_forward.1']
    #allocation7 [shape = 'u8[32768]{0}', space=vmem, size = 0x8000, scoped, tag = 'input window, operand 2']
    #allocation8 [shape = 'u8[24576]{0}', space=vmem, size = 0x6000, scoped, tag = 'input window, operand 3']
    #allocation9 [shape = 's32[2]{0}', space=sflag, size = 0x8, scoped, tag = 'scoped memory for series2vec_forward.1']
    #allocation10 [shape = 'u8[4096]{0}', space=vmem, size = 0x1000, scoped, tag = 'input window, operand 4']
    #allocation11 [shape = 'u8[2048]{0}', space=vmem, size = 0x800, scoped, tag = 'input window, operand 5']
    #allocation12 [shape = 's32[2]{0}', space=sflag, size = 0x8, scoped, tag = 'scoped memory for series2vec_forward.1']
    #allocation13 [shape = 'u8[8192]{0}', space=vmem, size = 0x2000, scoped, tag = 'input window, operand 6']
    #allocation14 [shape = 'u8[2048]{0}', space=vmem, size = 0x800, scoped, tag = 'output window, operand 0']
    %12 = vsyncpa [#allocation3], 0
    %s13 = scalar_lea.sflag [#allocation3], 1
    %14 = vsyncpa %s13, 0
    %15 = vsyncpa [#allocation6], 0
    %s16 = scalar_lea.sflag [#allocation6], 1
    %17 = vsyncpa %s16, 0
    %18 = vsyncpa [#allocation9], 0
    %s19 = scalar_lea.sflag [#allocation9], 1
    %20 = vsyncpa %s19, 0
    %21 = vsyncpa [#allocation12], 0
    %s22 = scalar_lea.sflag [#allocation12], 1
    %23 = vsyncpa %s22, 0
    %24 = vsyncpa [#allocation4], 0
    %s25 = scalar_lea.sflag [#allocation4], 1
    %26 = vsyncpa %s25, 0
    loop: start=0, step=1, limit=4
    $region2: #{series2vec_forward.1} parent=1 // loop_pre_header
      _
    $region3: #{series2vec_forward.1} parent=1 // loop_header
      %s28 = sphi 0, %s32
      %p29 = scmp.ge.s32.totalorder %s28, 4
      %s38 = sphi 0, %s40
      %s41 = sphi 0, %s38
      %s42 = sphi 0, %s41
      %s58 = sphi 0, %s42
      %s64 = sphi 0, %s66
      %s67 = sphi 0, %s64
      %s68 = sphi 0, %s67
      %s84 = sphi 0, %s68
      %s90 = sphi 0, %s92
      %s93 = sphi 0, %s90
      %s94 = sphi 0, %s93
      %s110 = sphi 0, %s94
      %s116 = sphi 0, %s118
      %s119 = sphi 0, %s116
      %s120 = sphi 0, %s119
      %s136 = sphi 0, %s120
      %s142 = sphi 0, %s144
      %s145 = sphi 0, %s142
      %s146 = sphi 0, %s145
      %s162 = sphi 0, %s146
      %s168 = sphi 0, %s170
      %s171 = sphi 0, %s168
      %s172 = sphi 0, %s171
      %s188 = sphi 0, %s172
      %s194 = sphi 0, %s196
      %s197 = sphi 0, %s194
      %s198 = sphi 0, %s197
      %s214 = sphi 0, %s198
      %s220 = sphi 0, %s222
      %s223 = sphi 0, %s220
      %s224 = sphi 0, %s223
      %s240 = sphi 0, %s224
    $region4: #{series2vec_forward.1} parent=1 // loop_header_branch
      %31 = sbr.rel (%p29) target = $region8
    $region5: #{series2vec_forward.1} parent=1 // loop_body
      %s33 = ssub.s32 %s28, 1
      %s34 = ssub.s32 %s28, 2
      %s35 = sadd.s32 %s28, 1
      %s36 = ssub.s32 %s28, %s35
      %p37 = scmp.eq.s32.totalorder %s36, 0
      %s39 = sadd.s32 %s38, 1
      %s40 = scalar_select %p37, %s38, %s39
      %p43 = pneg %p37
      %p44 = scmp.eq.s32.totalorder %s28, 1
      %p45 = por %p43, %p44
      %p46 = scmp.ne.s32.totalorder %s38, %s41
      %p47 = scmp.eq.s32.totalorder %s28, 0
      %p48 = por %p46, %p47
      %p49 = scmp.ne.s32.totalorder %s38, %s41
      %p50 = scmp.eq.s32.totalorder %s33, 1
      %p51 = por %p49, %p50
      %p52 = scmp.ne.s32.totalorder %s41, %s42
      %p53 = scmp.eq.s32.totalorder %s33, 0
      %p54 = por %p52, %p53
      %p55 = scmp.ne.s32.totalorder %s41, %s42
      %p56 = scmp.eq.s32.totalorder %s34, 1
      %p57 = por %p55, %p56
      %p59 = scmp.ne.s32.totalorder %s42, %s58
      %p60 = scmp.eq.s32.totalorder %s34, 0
      %p61 = por %p59, %p60
      %s62 = ssub.s32 %s28, %s35
      %p63 = scmp.eq.s32.totalorder %s62, 0
      %s65 = sadd.s32 %s64, 1
      %s66 = scalar_select %p63, %s64, %s65
      %p69 = pneg %p63
      %p70 = scmp.eq.s32.totalorder %s28, 1
      %p71 = por %p69, %p70
      %p72 = scmp.ne.s32.totalorder %s64, %s67
      %p73 = scmp.eq.s32.totalorder %s28, 0
      %p74 = por %p72, %p73
      %p75 = scmp.ne.s32.totalorder %s64, %s67
      %p76 = scmp.eq.s32.totalorder %s33, 1
      %p77 = por %p75, %p76
      %p78 = scmp.ne.s32.totalorder %s67, %s68
      %p79 = scmp.eq.s32.totalorder %s33, 0
      %p80 = por %p78, %p79
      %p81 = scmp.ne.s32.totalorder %s67, %s68
      %p82 = scmp.eq.s32.totalorder %s34, 1
      %p83 = por %p81, %p82
      %p85 = scmp.ne.s32.totalorder %s68, %s84
      %p86 = scmp.eq.s32.totalorder %s34, 0
      %p87 = por %p85, %p86
      %s88 = ssub.s32 %s28, %s35
      %p89 = scmp.eq.s32.totalorder %s88, 0
      %s91 = sadd.s32 %s90, 1
      %s92 = scalar_select %p89, %s90, %s91
      %p95 = pneg %p89
      %p96 = scmp.eq.s32.totalorder %s28, 1
      %p97 = por %p95, %p96
      %p98 = scmp.ne.s32.totalorder %s90, %s93
      %p99 = scmp.eq.s32.totalorder %s28, 0
      %p100 = por %p98, %p99
      %p101 = scmp.ne.s32.totalorder %s90, %s93
      %p102 = scmp.eq.s32.totalorder %s33, 1
      %p103 = por %p101, %p102
      %p104 = scmp.ne.s32.totalorder %s93, %s94
      %p105 = scmp.eq.s32.totalorder %s33, 0
      %p106 = por %p104, %p105
      %p107 = scmp.ne.s32.totalorder %s93, %s94
      %p108 = scmp.eq.s32.totalorder %s34, 1
      %p109 = por %p107, %p108
      %p111 = scmp.ne.s32.totalorder %s94, %s110
      %p112 = scmp.eq.s32.totalorder %s34, 0
      %p113 = por %p111, %p112
      %s114 = ssub.s32 %s28, %s35
      %p115 = scmp.eq.s32.totalorder %s114, 0
      %s117 = sadd.s32 %s116, 1
      %s118 = scalar_select %p115, %s116, %s117
      %p121 = pneg %p115
      %p122 = scmp.eq.s32.totalorder %s28, 1
      %p123 = por %p121, %p122
      %p124 = scmp.ne.s32.totalorder %s116, %s119
      %p125 = scmp.eq.s32.totalorder %s28, 0
      %p126 = por %p124, %p125
      %p127 = scmp.ne.s32.totalorder %s116, %s119
      %p128 = scmp.eq.s32.totalorder %s33, 1
      %p129 = por %p127, %p128
      %p130 = scmp.ne.s32.totalorder %s119, %s120
      %p131 = scmp.eq.s32.totalorder %s33, 0
      %p132 = por %p130, %p131
      %p133 = scmp.ne.s32.totalorder %s119, %s120
      %p134 = scmp.eq.s32.totalorder %s34, 1
      %p135 = por %p133, %p134
      %p137 = scmp.ne.s32.totalorder %s120, %s136
      %p138 = scmp.eq.s32.totalorder %s34, 0
      %p139 = por %p137, %p138
      %s140 = ssub.s32 %s28, %s35
      %p141 = scmp.eq.s32.totalorder %s140, 0
      %s143 = sadd.s32 %s142, 1
      %s144 = scalar_select %p141, %s142, %s143
      %p147 = pneg %p141
      %p148 = scmp.eq.s32.totalorder %s28, 1
      %p149 = por %p147, %p148
      %p150 = scmp.ne.s32.totalorder %s142, %s145
      %p151 = scmp.eq.s32.totalorder %s28, 0
      %p152 = por %p150, %p151
      %p153 = scmp.ne.s32.totalorder %s142, %s145
      %p154 = scmp.eq.s32.totalorder %s33, 1
      %p155 = por %p153, %p154
      %p156 = scmp.ne.s32.totalorder %s145, %s146
      %p157 = scmp.eq.s32.totalorder %s33, 0
      %p158 = por %p156, %p157
      %p159 = scmp.ne.s32.totalorder %s145, %s146
      %p160 = scmp.eq.s32.totalorder %s34, 1
      %p161 = por %p159, %p160
      %p163 = scmp.ne.s32.totalorder %s146, %s162
      %p164 = scmp.eq.s32.totalorder %s34, 0
      %p165 = por %p163, %p164
      %s166 = ssub.s32 %s28, %s35
      %p167 = scmp.eq.s32.totalorder %s166, 0
      %s169 = sadd.s32 %s168, 1
      %s170 = scalar_select %p167, %s168, %s169
      %p173 = pneg %p167
      %p174 = scmp.eq.s32.totalorder %s28, 1
      %p175 = por %p173, %p174
      %p176 = scmp.ne.s32.totalorder %s168, %s171
      %p177 = scmp.eq.s32.totalorder %s28, 0
      %p178 = por %p176, %p177
      %p179 = scmp.ne.s32.totalorder %s168, %s171
      %p180 = scmp.eq.s32.totalorder %s33, 1
      %p181 = por %p179, %p180
      %p182 = scmp.ne.s32.totalorder %s171, %s172
      %p183 = scmp.eq.s32.totalorder %s33, 0
      %p184 = por %p182, %p183
      %p185 = scmp.ne.s32.totalorder %s171, %s172
      %p186 = scmp.eq.s32.totalorder %s34, 1
      %p187 = por %p185, %p186
      %p189 = scmp.ne.s32.totalorder %s172, %s188
      %p190 = scmp.eq.s32.totalorder %s34, 0
      %p191 = por %p189, %p190
      %s192 = ssub.s32 %s28, %s35
      %p193 = scmp.eq.s32.totalorder %s192, 0
      %s195 = sadd.s32 %s194, 1
      %s196 = scalar_select %p193, %s194, %s195
      %p199 = pneg %p193
      %p200 = scmp.eq.s32.totalorder %s28, 1
      %p201 = por %p199, %p200
      %p202 = scmp.ne.s32.totalorder %s194, %s197
      %p203 = scmp.eq.s32.totalorder %s28, 0
      %p204 = por %p202, %p203
      %p205 = scmp.ne.s32.totalorder %s194, %s197
      %p206 = scmp.eq.s32.totalorder %s33, 1
      %p207 = por %p205, %p206
      %p208 = scmp.ne.s32.totalorder %s197, %s198
      %p209 = scmp.eq.s32.totalorder %s33, 0
      %p210 = por %p208, %p209
      %p211 = scmp.ne.s32.totalorder %s197, %s198
      %p212 = scmp.eq.s32.totalorder %s34, 1
      %p213 = por %p211, %p212
      %p215 = scmp.ne.s32.totalorder %s198, %s214
      %p216 = scmp.eq.s32.totalorder %s34, 0
      %p217 = por %p215, %p216
      %s218 = ssub.s32 %s28, %s35
      %p219 = scmp.eq.s32.totalorder %s218, 0
      %s221 = sadd.s32 %s220, 1
      %s222 = scalar_select %p219, %s220, %s221
      %p225 = pneg %p219
      %p226 = scmp.eq.s32.totalorder %s28, 1
      %p227 = por %p225, %p226
      %p228 = scmp.ne.s32.totalorder %s220, %s223
      %p229 = scmp.eq.s32.totalorder %s28, 0
      %p230 = por %p228, %p229
      %p231 = scmp.ne.s32.totalorder %s220, %s223
      %p232 = scmp.eq.s32.totalorder %s33, 1
      %p233 = por %p231, %p232
      %p234 = scmp.ne.s32.totalorder %s223, %s224
      %p235 = scmp.eq.s32.totalorder %s33, 0
      %p236 = por %p234, %p235
      %p237 = scmp.ne.s32.totalorder %s223, %s224
      %p238 = scmp.eq.s32.totalorder %s34, 1
      %p239 = por %p237, %p238
      %p241 = scmp.ne.s32.totalorder %s224, %s240
      %p242 = scmp.eq.s32.totalorder %s34, 0
      %p243 = por %p241, %p242
      %p244 = scmp.le.s32.totalorder 1, %s28
      %p245 = scmp.lt.s32.totalorder %s28, 3
      %p246 = pnand %p244, %p245
      %p247 = pneg %p246
      // Predicated region
      $region9: #{series2vec_forward.1} parent=5 // pred_check
        _
      $region10: #{series2vec_forward.1} parent=5 // pred_check_branch
        %249 = sbr.rel (%p246) target = $region12
      $region11: #{series2vec_forward.1} parent=5 // pred_region
        %s250 = ssub.s32 %s28, 1
      $region12: #{series2vec_forward.1} parent=5 // pred_fallthru
        _
      %p251 = scmp.lt.s32.totalorder %s28, 2
      // Predicated region
      $region13: #{series2vec_forward.1} parent=5 // pred_check
        %p252 = pneg %p251
      $region14: #{series2vec_forward.1} parent=5 // pred_check_branch
        %254 = sbr.rel (%p252) target = $region16
      $region15: #{series2vec_forward.1} parent=5 // pred_region
        // Predicated region
        $region17: #{series2vec_forward.1} parent=15 // pred_check
          %p255 = pneg %p48
        $region18: #{series2vec_forward.1} parent=15 // pred_check_branch
          %257 = sbr.rel (%p255) target = $region20
        $region19: #{series2vec_forward.1} parent=15 // pred_region
          %s258 = sand.u32 %s38, 1
          %s259 = scalar_lea.sflag [#allocation3], %s258
          %s260 = sand.u32 %s38, 1
          %s261 = smul.addr %s260, 12
          %s262 = scalar_lea.vmem [#allocation2], %s261
          %s264 = ssub.s32 192, 192
          %265 = vsyncadd %s259, %s264
          %s266 = smul.addr %s28, 3
          %s267 = smul.addr %s266, 64
          %s268 = scalar_lea.hbm %s0, %s267
          %s269 = sshll.u32 %s262, 4
          %s270 = int_to_ptr.vmem [resolvable:$true] %s269
          %275 = dma.hbm_to_vmem [thread:$0]  %s268, 192, %s270, %s259, 64, 64, 4
        $region20: #{series2vec_forward.1} parent=15 // pred_fallthru
          _
        // Predicated region
        $region21: #{series2vec_forward.1} parent=15 // pred_check
          %p276 = pneg %p74
        $region22: #{series2vec_forward.1} parent=15 // pred_check_branch
          %278 = sbr.rel (%p276) target = $region24
        $region23: #{series2vec_forward.1} parent=15 // pred_region
          %s279 = sand.u32 %s28, 1
          %s280 = scalar_lea.sflag [#allocation6], %s279
          %s281 = sand.u32 %s64, 1
          %s282 = smul.addr %s281, 16
          %s283 = scalar_lea.vmem [#allocation5], %s282
          %s285 = ssub.s32 256, 256
          %286 = vsyncadd %s280, %s285
          %s287 = smul.addr %s28, 4
          %s288 = smul.addr %s287, 64
          %s289 = scalar_lea.hbm %s1, %s288
          %s290 = sshll.u32 %s283, 4
          %s291 = int_to_ptr.vmem [resolvable:$true] %s290
          %296 = dma.hbm_to_vmem [thread:$0]  %s289, 256, %s291, %s280, 64, 64, 4
        $region24: #{series2vec_forward.1} parent=15 // pred_fallthru
          _
        // Predicated region
        $region25: #{series2vec_forward.1} parent=15 // pred_check
          %p297 = pneg %p100
        $region26: #{series2vec_forward.1} parent=15 // pred_check_branch
          %299 = sbr.rel (%p297) target = $region28
        $region27: #{series2vec_forward.1} parent=15 // pred_region
          %s300 = sand.u32 %s28, 1
          %s301 = scalar_lea.sflag [#allocation6], %s300
          %s302 = sand.u32 %s90, 1
          %s303 = smul.addr %s302, 32
          %s304 = scalar_lea.vmem [#allocation7], %s303
          %s306 = ssub.s32 512, 512
          %307 = vsyncadd %s301, %s306
          %s308 = smul.addr %s28, 8
          %s309 = smul.addr %s308, 64
          %s310 = scalar_lea.hbm %s2, %s309
          %s311 = sshll.u32 %s304, 4
          %s312 = int_to_ptr.vmem [resolvable:$true] %s311
          %317 = dma.hbm_to_vmem [thread:$0]  %s310, 512, %s312, %s301, 64, 64, 4
        $region28: #{series2vec_forward.1} parent=15 // pred_fallthru
          _
        // Predicated region
        $region29: #{series2vec_forward.1} parent=15 // pred_check
          %p318 = pneg %p126
        $region30: #{series2vec_forward.1} parent=15 // pred_check_branch
          %320 = sbr.rel (%p318) target = $region32
        $region31: #{series2vec_forward.1} parent=15 // pred_region
          %s321 = sand.u32 %s28, 1
          %s322 = scalar_lea.sflag [#allocation9], %s321
          %s323 = sand.u32 %s116, 1
          %s324 = smul.addr %s323, 24
          %s325 = scalar_lea.vmem [#allocation8], %s324
          %s327 = ssub.s32 384, 384
          %328 = vsyncadd %s322, %s327
          %s329 = smul.addr %s28, 6
          %s330 = smul.addr %s329, 64
          %s331 = scalar_lea.hbm %s3, %s330
          %s332 = sshll.u32 %s325, 4
          %s333 = int_to_ptr.vmem [resolvable:$true] %s332
          %338 = dma.hbm_to_vmem [thread:$0]  %s331, 384, %s333, %s322, 64, 64, 4
        $region32: #{series2vec_forward.1} parent=15 // pred_fallthru
          _
        // Predicated region
        $region33: #{series2vec_forward.1} parent=15 // pred_check
          %p339 = pneg %p152
        $region34: #{series2vec_forward.1} parent=15 // pred_check_branch
          %341 = sbr.rel (%p339) target = $region36
        $region35: #{series2vec_forward.1} parent=15 // pred_region
          %s342 = sand.u32 %s28, 1
          %s343 = scalar_lea.sflag [#allocation9], %s342
          %s344 = sand.u32 %s142, 1
          %s345 = smul.addr %s344, 4
          %s346 = scalar_lea.vmem [#allocation10], %s345
          %s348 = ssub.s32 64, 64
          %349 = vsyncadd %s343, %s348
          %s350 = smul.addr %s28, 64
          %s351 = scalar_lea.hbm %s4, %s350
          %s353 = sshll.u32 %s346, 4
          %s354 = int_to_ptr.vmem [resolvable:$true] %s353
          %356 = dma.hbm_to_vmem [thread:$0]  %s351, 64, %s354, %s343
        $region36: #{series2vec_forward.1} parent=15 // pred_fallthru
          _
        // Predicated region
        $region37: #{series2vec_forward.1} parent=15 // pred_check
          %p357 = pneg %p178
        $region38: #{series2vec_forward.1} parent=15 // pred_check_branch
          %359 = sbr.rel (%p357) target = $region40
        $region39: #{series2vec_forward.1} parent=15 // pred_region
          %s360 = sand.u32 %s28, 1
          %s361 = scalar_lea.sflag [#allocation12], %s360
          %s362 = sand.u32 %s168, 1
          %s363 = smul.addr %s362, 2
          %s364 = scalar_lea.vmem [#allocation11], %s363
          %s366 = ssub.s32 32, 32
          %367 = vsyncadd %s361, %s366
          %s368 = smul.addr %s28, 32
          %s369 = scalar_lea.hbm %s5, %s368
          %s371 = sshll.u32 %s364, 4
          %s372 = int_to_ptr.vmem [resolvable:$true] %s371
          %374 = dma.hbm_to_vmem [thread:$0]  %s369, 32, %s372, %s361
        $region40: #{series2vec_forward.1} parent=15 // pred_fallthru
          _
        // Predicated region
        $region41: #{series2vec_forward.1} parent=15 // pred_check
          %p375 = pneg %p204
        $region42: #{series2vec_forward.1} parent=15 // pred_check_branch
          %377 = sbr.rel (%p375) target = $region44
        $region43: #{series2vec_forward.1} parent=15 // pred_region
          %s378 = sand.u32 %s28, 1
          %s379 = scalar_lea.sflag [#allocation12], %s378
          %s380 = sand.u32 %s194, 1
          %s381 = smul.addr %s380, 8
          %s382 = scalar_lea.vmem [#allocation13], %s381
          %s384 = ssub.s32 128, 128
          %385 = vsyncadd %s379, %s384
          %s386 = smul.addr %s28, 2
          %s387 = smul.addr %s386, 64
          %s388 = scalar_lea.hbm %s6, %s387
          %s389 = sshll.u32 %s382, 4
          %s390 = int_to_ptr.vmem [resolvable:$true] %s389
          %395 = dma.hbm_to_vmem [thread:$0]  %s388, 128, %s390, %s379, 64, 64, 4
        $region44: #{series2vec_forward.1} parent=15 // pred_fallthru
          _
      $region16: #{series2vec_forward.1} parent=5 // pred_fallthru
        _
      %p396 = scmp.le.s32.totalorder 1, %s28
      %p397 = scmp.lt.s32.totalorder %s28, 3
      %p398 = pnand %p396, %p397
      %p399 = pneg %p398
      // Predicated region
      $region45: #{series2vec_forward.1} parent=5 // pred_check
        _
      $region46: #{series2vec_forward.1} parent=5 // pred_check_branch
        %401 = sbr.rel (%p398) target = $region48
      $region47: #{series2vec_forward.1} parent=5 // pred_region
        %s402 = ssub.s32 %s28, 1
        %s403 = sand.u32 %s41, 1
        %s404 = scalar_lea.sflag [#allocation3], %s403
        %s405 = sand.u32 %s41, 1
        %s406 = smul.addr %s405, 12
        %s407 = scalar_lea.vmem [#allocation2], %s406
        // Predicated region
        $region49: #{series2vec_forward.1} parent=47 // pred_check
          %p408 = pneg %p54
        $region50: #{series2vec_forward.1} parent=47 // pred_check_branch
          %410 = sbr.rel (%p408) target = $region52
        $region51: #{series2vec_forward.1} parent=47 // pred_region
          %411 = dma.done %s404, 192
        $region52: #{series2vec_forward.1} parent=47 // pred_fallthru
          _
        %s412 = sand.u32 %s33, 1
        %s413 = scalar_lea.sflag [#allocation6], %s412
        %s414 = sand.u32 %s67, 1
        %s415 = smul.addr %s414, 16
        %s416 = scalar_lea.vmem [#allocation5], %s415
        // Predicated region
        $region53: #{series2vec_forward.1} parent=47 // pred_check
          %p417 = pneg %p80
        $region54: #{series2vec_forward.1} parent=47 // pred_check_branch
          %419 = sbr.rel (%p417) target = $region56
        $region55: #{series2vec_forward.1} parent=47 // pred_region
          %420 = dma.done %s413, 256
        $region56: #{series2vec_forward.1} parent=47 // pred_fallthru
          _
        %s421 = sand.u32 %s33, 1
        %s422 = scalar_lea.sflag [#allocation6], %s421
        %s423 = sand.u32 %s93, 1
        %s424 = smul.addr %s423, 32
        %s425 = scalar_lea.vmem [#allocation7], %s424
        // Predicated region
        $region57: #{series2vec_forward.1} parent=47 // pred_check
          %p426 = pneg %p106
        $region58: #{series2vec_forward.1} parent=47 // pred_check_branch
          %428 = sbr.rel (%p426) target = $region60
        $region59: #{series2vec_forward.1} parent=47 // pred_region
          %429 = dma.done %s422, 512
        $region60: #{series2vec_forward.1} parent=47 // pred_fallthru
          _
        %s430 = sand.u32 %s33, 1
        %s431 = scalar_lea.sflag [#allocation9], %s430
        %s432 = sand.u32 %s119, 1
        %s433 = smul.addr %s432, 24
        %s434 = scalar_lea.vmem [#allocation8], %s433
        // Predicated region
        $region61: #{series2vec_forward.1} parent=47 // pred_check
          %p435 = pneg %p132
        $region62: #{series2vec_forward.1} parent=47 // pred_check_branch
          %437 = sbr.rel (%p435) target = $region64
        $region63: #{series2vec_forward.1} parent=47 // pred_region
          %438 = dma.done %s431, 384
        $region64: #{series2vec_forward.1} parent=47 // pred_fallthru
          _
        %s439 = sand.u32 %s33, 1
        %s440 = scalar_lea.sflag [#allocation9], %s439
        %s441 = sand.u32 %s145, 1
        %s442 = smul.addr %s441, 4
        %s443 = scalar_lea.vmem [#allocation10], %s442
        // Predicated region
        $region65: #{series2vec_forward.1} parent=47 // pred_check
          %p444 = pneg %p158
        $region66: #{series2vec_forward.1} parent=47 // pred_check_branch
          %446 = sbr.rel (%p444) target = $region68
        $region67: #{series2vec_forward.1} parent=47 // pred_region
          %447 = dma.done %s440, 64
        $region68: #{series2vec_forward.1} parent=47 // pred_fallthru
          _
        %s448 = sand.u32 %s33, 1
        %s449 = scalar_lea.sflag [#allocation12], %s448
        %s450 = sand.u32 %s171, 1
        %s451 = smul.addr %s450, 2
        %s452 = scalar_lea.vmem [#allocation11], %s451
        // Predicated region
        $region69: #{series2vec_forward.1} parent=47 // pred_check
          %p453 = pneg %p184
        $region70: #{series2vec_forward.1} parent=47 // pred_check_branch
          %455 = sbr.rel (%p453) target = $region72
        $region71: #{series2vec_forward.1} parent=47 // pred_region
          %456 = dma.done %s449, 32
        $region72: #{series2vec_forward.1} parent=47 // pred_fallthru
          _
        %s457 = sand.u32 %s33, 1
        %s458 = scalar_lea.sflag [#allocation12], %s457
        %s459 = sand.u32 %s197, 1
        %s460 = smul.addr %s459, 8
        %s461 = scalar_lea.vmem [#allocation13], %s460
        // Predicated region
        $region73: #{series2vec_forward.1} parent=47 // pred_check
          %p462 = pneg %p210
        $region74: #{series2vec_forward.1} parent=47 // pred_check_branch
          %464 = sbr.rel (%p462) target = $region76
        $region75: #{series2vec_forward.1} parent=47 // pred_region
          %465 = dma.done %s458, 128
        $region76: #{series2vec_forward.1} parent=47 // pred_fallthru
          _
        %s466 = sand.u32 %s41, 1
        %s467 = scalar_lea.sflag [#allocation3], %s466
        %s468 = sand.u32 %s41, 1
        %s469 = smul.addr %s468, 12
        %s470 = scalar_lea.vmem [#allocation2], %s469
        %p471 = pneg %p54
        %p472 = pneg %p51
        %s473 = sand.u32 %s33, 1
        %s474 = scalar_lea.sflag [#allocation6], %s473
        %s475 = sand.u32 %s67, 1
        %s476 = smul.addr %s475, 16
        %s477 = scalar_lea.vmem [#allocation5], %s476
        %p478 = pneg %p80
        %p479 = pneg %p77
        %s480 = sand.u32 %s33, 1
        %s481 = scalar_lea.sflag [#allocation6], %s480
        %s482 = sand.u32 %s93, 1
        %s483 = smul.addr %s482, 32
        %s484 = scalar_lea.vmem [#allocation7], %s483
        %p485 = pneg %p106
        %p486 = pneg %p103
        %s487 = sand.u32 %s33, 1
        %s488 = scalar_lea.sflag [#allocation9], %s487
        %s489 = sand.u32 %s119, 1
        %s490 = smul.addr %s489, 24
        %s491 = scalar_lea.vmem [#allocation8], %s490
        %p492 = pneg %p132
        %p493 = pneg %p129
        %s494 = sand.u32 %s33, 1
        %s495 = scalar_lea.sflag [#allocation9], %s494
        %s496 = sand.u32 %s145, 1
        %s497 = smul.addr %s496, 4
        %s498 = scalar_lea.vmem [#allocation10], %s497
        %p499 = pneg %p158
        %p500 = pneg %p155
        %s501 = sand.u32 %s33, 1
        %s502 = scalar_lea.sflag [#allocation12], %s501
        %s503 = sand.u32 %s171, 1
        %s504 = smul.addr %s503, 2
        %s505 = scalar_lea.vmem [#allocation11], %s504
        %p506 = pneg %p184
        %p507 = pneg %p181
        %s508 = sand.u32 %s33, 1
        %s509 = scalar_lea.sflag [#allocation12], %s508
        %s510 = sand.u32 %s197, 1
        %s511 = smul.addr %s510, 8
        %s512 = scalar_lea.vmem [#allocation13], %s511
        %p513 = pneg %p210
        %p514 = pneg %p207
        %p515 = pneg %p236
        %p516 = pneg %p233
        %s517 = sand.u32 %s223, 1
        %s518 = scalar_lea.sflag [#allocation4], %s517
        %s519 = sand.u32 %s223, 1
        %s520 = smul.addr %s519, 2
        %s521 = scalar_lea.vmem [#allocation14], %s520
        %v523 = vld [vmem:[%s443] sm:$0xf]
        %v524 = vld [vmem:[%s452] sm:$0x3]
        %v525 = vld [vmem:[%s407] sm:$0xf]
        %v526 = vld [vmem:[%s407 + $0x4] sm:$0xf]
        %v527 = vld [vmem:[%s407 + $0x8] sm:$0x1]
        %v528 = vld [vmem:[%s416] sm:$0xf]
        %v529 = vld [vmem:[%s416 + $0x4] sm:$0xf]
        %v530 = vld [vmem:[%s416 + $0x8] sm:$0xf]
        %v531 = vld [vmem:[%s416 + $0xc] sm:$0xf]
        %v535 = vunpack.c.l.b16 %v525
        %v536 = vunpack.c.l.b16 %v526
        %v537 = vunpack.c.l.b16 %v527
        %v538 = vpack.c.b16 %v536, %v535
        %v539 = vpack.c.b16 %v537, %v537
        %v544 = vunpack.c.l.b16 %v528
        %v545 = vunpack.c.l.b16 %v529
        %v546 = vunpack.c.l.b16 %v530
        %v547 = vunpack.c.l.b16 %v531
        %v548 = vpack.c.b16 %v545, %v544
        %v549 = vpack.c.b16 %v547, %v546
        %vm552 = vcmask 261120
        %v554 = vsel %vm552, %v538, 0
        %v557 = vsel %vm552, %v539, 0
        %559 = vmatprep.subr.bf16.mxu0 0
        %560 = vmatpush1.bf16.msra.mxu0 %v548
        %561 = vmatprep.subr.bf16.mxu0 0
        %562 = vmatpush1.bf16.msra.mxu0 %v549
        %563 = vmatprep.subr.bf16.mxu0 0
        %564 = vmatpush1.bf16.msra.mxu0 0
        %565 = vmatprep.subr.bf16.mxu0 0
        %566 = vmatpush1.bf16.msra.mxu0 0
        %567 = vmatprep.subr.bf16.mxu0 0
        %568 = vmatpush1.bf16.msra.mxu0 0
        %569 = vmatprep.subr.bf16.mxu0 0
        %570 = vmatpush1.bf16.msra.mxu0 0
        %571 = vmatprep.subr.bf16.mxu0 0
        %572 = vmatpush1.bf16.msra.mxu0 0
        %573 = vmatprep.subr.bf16.mxu0 0
        %574 = vmatpush1.bf16.msra.mxu0 0
        %575 = vmatprep.subr.bf16.mxu0 0
        %576 = vmatpush1.bf16.msra.mxu0 0
        %577 = vmatprep.subr.bf16.mxu0 0
        %578 = vmatpush1.bf16.msra.mxu0 0
        %579 = vmatprep.subr.bf16.mxu0 0
        %580 = vmatpush1.bf16.msra.mxu0 0
        %581 = vmatprep.subr.bf16.mxu0 0
        %582 = vmatpush1.bf16.msra.mxu0 0
        %583 = vmatprep.subr.bf16.mxu0 0
        %584 = vmatpush1.bf16.msra.mxu0 0
        %585 = vmatprep.subr.bf16.mxu0 0
        %586 = vmatpush1.bf16.msra.mxu0 0
        %587 = vmatprep.subr.bf16.mxu0 0
        %588 = vmatpush1.bf16.msra.mxu0 0
        %589 = vmatprep.subr.bf16.mxu0 0
        %590 = vmatpush1.bf16.msra.mxu0 0
        %591 = vmatprep.mubr.bf16.mxu0 0
        %592 = vmatmul.mubr.bf16.gmra.mrb[0].mxu0 %v554
        %v593 = vpop.f32.mrb[0].mxu0
        %v594 = vadd.f32 0.0, %v593
        %v595 = vpop.f32.mrb[0].mxu0
        %v596 = vpop.f32.mrb[0].mxu0
        %v597 = vadd.f32 0.0, %v596
        %v598 = vpop.f32.mrb[0].mxu0
        %599 = vmatprep.mubr.bf16.mxu0 0
        %600 = vmatmul.mubr.bf16.gmra.mrb[0].mxu0 %v557
        %v601 = vpop.f32.mrb[0].mxu0
        %v602 = vadd.f32 0.0, %v601
        %v603 = vpop.f32.mrb[0].mxu0
        %v604 = vpop.f32.mrb[0].mxu0
        %v605 = vpop.f32.mrb[0].mxu0
        %606 = vdwg.mxu0
        %vm607 = vcmask 523264
        %v608 = vsel %vm607, %v594, 0.0
        %v609 = vsel %vm607, %v597, 0.0
        %v610 = vadd.f32 %v608, %v609
        %vm611 = vcmask 517120
        %v612 = vsel %vm611, %v602, 0.0
        %v613 = vadd.f32 %v610, %v612
        %v614 = vrot.slane %v613, 4
        %v615 = vadd.f32 %v613, %v614
        %v616 = vrot.slane %v615, 2
        %v617 = vadd.f32 %v615, %v616
        %v618 = vrot.slane %v617, 1
        %v619 = vadd.f32 %v617, %v618
        %621 = vrot.lane.b32.xlu0 %v619, 112
        %v622 = vpop.permute.xlu0 %621
        %v624 = vadd.f32 %v619, %v622
        %625 = vrot.lane.b32.xlu0 %v619, 96
        %v626 = vpop.permute.xlu0 %625
        %v628 = vadd.f32 %v624, %v626
        %629 = vrot.lane.b32.xlu0 %v619, 80
        %v630 = vpop.permute.xlu0 %629
        %v632 = vadd.f32 %v628, %v630
        %v633 = vrcp.pop 72.0
        %v634 = vmul.f32 %v632, %v633
        %636 = vrot.lane.b32.xlu0 %v634, 16
        %v637 = vpop.permute.xlu0 %636
        %639 = vrot.lane.b32.xlu0 %v634, 32
        %v640 = vpop.permute.xlu0 %639
        %642 = vrot.lane.b32.xlu0 %v634, 48
        %v643 = vpop.permute.xlu0 %642
        %vm645 = vcmask 130048
        %v646 = vsel %vm645, %v634, %v637
        %v647 = vsel %vm552, %v646, %v640
        %vm648 = vcmask 392192
        %v649 = vsel %vm648, %v647, %v643
        %v650 = vlaneseq
        %v651 = vshrl.u32 %v650, 7
        %v652 = vsub.s32 0, %v651
        %v653 = vrot.slane %v649, %v652
        %v654 = vsub.f32 %v594, %v653
        %v655 = vsub.f32 %v597, %v653
        %v656 = vsub.f32 %v602, %v653
        %v657 = vmul.f32 %v654, %v654
        %v658 = vmul.f32 %v655, %v655
        %v659 = vmul.f32 %v656, %v656
        %v660 = vsel %vm607, %v657, 0.0
        %v661 = vsel %vm607, %v658, 0.0
        %v662 = vadd.f32 %v660, %v661
        %v663 = vsel %vm611, %v659, 0.0
        %v664 = vadd.f32 %v662, %v663
        %v665 = vrot.slane %v664, 4
        %v666 = vadd.f32 %v664, %v665
        %v667 = vrot.slane %v666, 2
        %v668 = vadd.f32 %v666, %v667
        %v669 = vrot.slane %v668, 1
        %v670 = vadd.f32 %v668, %v669
        %672 = vrot.lane.b32.xlu0 %v670, 112
        %v673 = vpop.permute.xlu0 %672
        %v675 = vadd.f32 %v670, %v673
        %676 = vrot.lane.b32.xlu0 %v670, 96
        %v677 = vpop.permute.xlu0 %676
        %v679 = vadd.f32 %v675, %v677
        %680 = vrot.lane.b32.xlu0 %v670, 80
        %v681 = vpop.permute.xlu0 %680
        %v683 = vadd.f32 %v679, %v681
        %v684 = vmul.f32 %v683, %v633
        %v685 = vadd.f32 %v684, 1e-05
        %v686 = vrsqrt.pop %v685
        %v687 = vmul.f32 %v523, %v686
        %689 = vrot.lane.b32.xlu0 %v687, 16
        %v690 = vpop.permute.xlu0 %689
        %692 = vrot.lane.b32.xlu0 %v687, 32
        %v693 = vpop.permute.xlu0 %692
        %695 = vrot.lane.b32.xlu0 %v687, 48
        %v696 = vpop.permute.xlu0 %695
        %v698 = vsel %vm645, %v687, %v690
        %v699 = vsel %vm552, %v698, %v693
        %v700 = vsel %vm648, %v699, %v696
        %v701 = vlaneseq
        %v702 = vshrl.u32 %v701, 7
        %v703 = vsub.s32 0, %v702
        %v704 = vrot.slane %v700, %v703
        %v705 = vmul.f32 %v654, %v704
        %v706 = vmul.f32 %v655, %v704
        %v707 = vmul.f32 %v656, %v704
        %709 = vrot.lane.b32.xlu0 %v523, 16
        %v710 = vpop.permute.xlu0 %709
        %712 = vrot.lane.b32.xlu0 %v523, 32
        %v713 = vpop.permute.xlu0 %712
        %715 = vrot.lane.b32.xlu0 %v523, 48
        %v716 = vpop.permute.xlu0 %715
        %v718 = vsel %vm645, %v523, %v710
        %v719 = vsel %vm552, %v718, %v713
        %v720 = vsel %vm648, %v719, %v716
        %v721 = vlaneseq
        %v722 = vshrl.u32 %v721, 7
        %v723 = vsub.s32 1, %v722
        %v724 = vrot.slane %v720, %v723
        %v725 = vadd.f32 %v705, %v724
        %v726 = vadd.f32 %v706, %v724
        %v727 = vadd.f32 %v707, %v724
        %v728 = vmul.f32 %v725, 0.5
        %v729 = vmul.f32 %v726, 0.5
        %v730 = vmul.f32 %v727, 0.5
        %v731 = vmul.f32 %v725, 0.70710677
        %v732 = vmul.f32 %v726, 0.70710677
        %v733 = vmul.f32 %v727, 0.70710677
        %v734 = verf.f32.pop %v731
        %v735 = verf.f32.pop %v732
        %v736 = verf.f32.pop %v733
        %v737 = vadd.f32 %v734, 1.0
        %v738 = vadd.f32 %v735, 1.0
        %v739 = vadd.f32 %v736, 1.0
        %v740 = vmul.f32 %v728, %v737
        %v741 = vmul.f32 %v729, %v738
        %v742 = vmul.f32 %v730, %v739
        %v743 = vpack.c.bf16 %v741, %v740
        %v744 = vpack.c.bf16 %v742, %v742
        %v745 = vld [vmem:[%s425] sm:$0xf]
        %v746 = vld [vmem:[%s425 + $0x4] sm:$0xf]
        %v747 = vld [vmem:[%s425 + $0x8] sm:$0xf]
        %v748 = vld [vmem:[%s425 + $0xc] sm:$0xf]
        %v749 = vld [vmem:[%s425 + $0x10] sm:$0xf]
        %v750 = vld [vmem:[%s425 + $0x14] sm:$0xf]
        %v751 = vld [vmem:[%s425 + $0x18] sm:$0xf]
        %v752 = vld [vmem:[%s425 + $0x1c] sm:$0xf]
        %v761 = vunpack.c.l.b16 %v745
        %v762 = vunpack.c.l.b16 %v746
        %v763 = vunpack.c.l.b16 %v747
        %v764 = vunpack.c.l.b16 %v748
        %v765 = vunpack.c.l.b16 %v749
        %v766 = vunpack.c.l.b16 %v750
        %v767 = vunpack.c.l.b16 %v751
        %v768 = vunpack.c.l.b16 %v752
        %v769 = vpack.c.b16 %v762, %v761
        %v770 = vpack.c.b16 %v764, %v763
        %v771 = vpack.c.b16 %v766, %v765
        %v772 = vpack.c.b16 %v768, %v767
        %v778 = vsel %vm607, %v743, 0
        %v781 = vsel %vm607, %v744, 0
        %783 = vmatprep.subr.bf16.mxu0 0
        %784 = vmatpush1.bf16.msra.mxu0 %v769
        %785 = vmatprep.subr.bf16.mxu0 0
        %786 = vmatpush1.bf16.msra.mxu0 %v770
        %787 = vmatprep.subr.bf16.mxu0 0
        %788 = vmatpush1.bf16.msra.mxu0 %v771
        %789 = vmatprep.subr.bf16.mxu0 0
        %790 = vmatpush1.bf16.msra.mxu0 %v772
        %791 = vmatprep.subr.bf16.mxu0 0
        %792 = vmatpush1.bf16.msra.mxu0 0
        %793 = vmatprep.subr.bf16.mxu0 0
        %794 = vmatpush1.bf16.msra.mxu0 0
        %795 = vmatprep.subr.bf16.mxu0 0
        %796 = vmatpush1.bf16.msra.mxu0 0
        %797 = vmatprep.subr.bf16.mxu0 0
        %798 = vmatpush1.bf16.msra.mxu0 0
        %799 = vmatprep.subr.bf16.mxu0 0
        %800 = vmatpush1.bf16.msra.mxu0 0
        %801 = vmatprep.subr.bf16.mxu0 0
        %802 = vmatpush1.bf16.msra.mxu0 0
        %803 = vmatprep.subr.bf16.mxu0 0
        %804 = vmatpush1.bf16.msra.mxu0 0
        %805 = vmatprep.subr.bf16.mxu0 0
        %806 = vmatpush1.bf16.msra.mxu0 0
        %807 = vmatprep.subr.bf16.mxu0 0
        %808 = vmatpush1.bf16.msra.mxu0 0
        %809 = vmatprep.subr.bf16.mxu0 0
        %810 = vmatpush1.bf16.msra.mxu0 0
        %811 = vmatprep.subr.bf16.mxu0 0
        %812 = vmatpush1.bf16.msra.mxu0 0
        %813 = vmatprep.subr.bf16.mxu0 0
        %814 = vmatpush1.bf16.msra.mxu0 0
        %815 = vmatprep.mubr.bf16.mxu0 0
        %816 = vmatmul.mubr.bf16.gmra.mrb[0].mxu0 %v778
        %v817 = vpop.f32.mrb[0].mxu0
        %v818 = vadd.f32 0.0, %v817
        %v819 = vpop.f32.mrb[0].mxu0
        %v820 = vpop.f32.mrb[0].mxu0
        %v821 = vadd.f32 0.0, %v820
        %v822 = vpop.f32.mrb[0].mxu0
        %823 = vmatprep.mubr.bf16.mxu0 0
        %824 = vmatmul.mubr.bf16.gmra.mrb[0].mxu0 %v781
        %v825 = vpop.f32.mrb[0].mxu0
        %v826 = vadd.f32 0.0, %v825
        %v827 = vpop.f32.mrb[0].mxu0
        %v828 = vpop.f32.mrb[0].mxu0
        %v829 = vpop.f32.mrb[0].mxu0
        %830 = vdwg.mxu0
        %v831 = vsel %vm645, %v818, 0.0
        %v832 = vsel %vm645, %v821, 0.0
        %v833 = vadd.f32 %v831, %v832
        %vm834 = vcmask 123904
        %v835 = vsel %vm834, %v826, 0.0
        %v836 = vadd.f32 %v833, %v835
        %v837 = vrot.slane %v836, 4
        %v838 = vadd.f32 %v836, %v837
        %v839 = vrot.slane %v838, 2
        %v840 = vadd.f32 %v838, %v839
        %v841 = vrot.slane %v840, 1
        %v842 = vadd.f32 %v840, %v841
        %v843 = vrcp.pop 18.0
        %v844 = vmul.f32 %v842, %v843
        %v845 = vsub.f32 %v818, %v844
        %v846 = vsub.f32 %v821, %v844
        %v847 = vsub.f32 %v826, %v844
        %v848 = vmul.f32 %v845, %v845
        %v849 = vmul.f32 %v846, %v846
        %v850 = vmul.f32 %v847, %v847
        %v851 = vsel %vm645, %v848, 0.0
        %v852 = vsel %vm645, %v849, 0.0
        %v853 = vadd.f32 %v851, %v852
        %v854 = vsel %vm834, %v850, 0.0
        %v855 = vadd.f32 %v853, %v854
        %v856 = vrot.slane %v855, 4
        %v857 = vadd.f32 %v855, %v856
        %v858 = vrot.slane %v857, 2
        %v859 = vadd.f32 %v857, %v858
        %v860 = vrot.slane %v859, 1
        %v861 = vadd.f32 %v859, %v860
        %v862 = vmul.f32 %v861, %v843
        %v863 = vadd.f32 %v862, 1e-05
        %v864 = vrsqrt.pop %v863
        %v865 = vmul.f32 %v523, %v864
        %v866 = vlaneseq
        %v867 = vshrl.u32 %v866, 7
        %v868 = vsub.s32 2, %v867
        %v869 = vrot.slane %v865, %v868
        %v870 = vmul.f32 %v845, %v869
        %v871 = vmul.f32 %v846, %v869
        %v872 = vmul.f32 %v847, %v869
        %v873 = vlaneseq
        %v874 = vshrl.u32 %v873, 7
        %v875 = vsub.s32 3, %v874
        %v876 = vrot.slane %v523, %v875
        %v877 = vadd.f32 %v870, %v876
        %v878 = vadd.f32 %v871, %v876
        %v879 = vadd.f32 %v872, %v876
        %v880 = vmul.f32 %v877, 0.5
        %v881 = vmul.f32 %v878, 0.5
        %v882 = vmul.f32 %v879, 0.5
        %v883 = vmul.f32 %v877, 0.70710677
        %v884 = vmul.f32 %v878, 0.70710677
        %v885 = vmul.f32 %v879, 0.70710677
        %v886 = verf.f32.pop %v883
        %v887 = verf.f32.pop %v884
        %v888 = verf.f32.pop %v885
        %v889 = vadd.f32 %v886, 1.0
        %v890 = vadd.f32 %v887, 1.0
        %v891 = vadd.f32 %v888, 1.0
        %v892 = vmul.f32 %v880, %v889
        %v893 = vmul.f32 %v881, %v890
        %v894 = vmul.f32 %v882, %v891
        %v895 = vpack.c.bf16 %v893, %v892
        %v896 = vpack.c.bf16 %v894, %v894
        %v899 = vcombine.high %v895, %v895
        %v901 = vunpack.c.l.s4 1966171168
        %v902 = vunpack.c.0.s8 %v901
        %v903 = vlaneseq
        %v904 = vshrl.u32 %v903, 7
        %v905 = vsub.s32 %v902, %v904
        %v906 = vrot.slane %v895, %v905
        %v908 = vunpack.c.l.s4 1966171168
        %v909 = vunpack.c.0.s8 %v908
        %v910 = vlaneseq
        %v911 = vshrl.u32 %v910, 7
        %v912 = vsub.s32 %v909, %v911
        %v913 = vrot.slane %v899, %v912
        %v914 = vcombine.high %v906, %v906
        %v915 = vcombine.high %v913, %v913
        %v917 = vunpack.c.l.s4 1966171168
        %v918 = vunpack.c.0.s8 %v917
        %v919 = vlaneseq
        %v920 = vshrl.u32 %v919, 7
        %v921 = vsub.s32 %v918, %v920
        %v922 = vrot.slane %v906, %v921
        %v924 = vunpack.c.l.s4 1966171168
        %v925 = vunpack.c.0.s8 %v924
        %v926 = vlaneseq
        %v927 = vshrl.u32 %v926, 7
        %v928 = vsub.s32 %v925, %v927
        %v929 = vrot.slane %v913, %v928
        %v931 = vunpack.c.l.s4 1966171168
        %v932 = vunpack.c.0.s8 %v931
        %v933 = vlaneseq
        %v934 = vshrl.u32 %v933, 7
        %v935 = vsub.s32 %v932, %v934
        %v936 = vrot.slane %v914, %v935
        %v938 = vunpack.c.l.s4 1966171168
        %v939 = vunpack.c.0.s8 %v938
        %v940 = vlaneseq
        %v941 = vshrl.u32 %v940, 7
        %v942 = vsub.s32 %v939, %v941
        %v943 = vrot.slane %v915, %v942
        %v944 = vcombine.high %v922, %v922
        %v945 = vcombine.high %v929, %v929
        %v946 = vcombine.high %v936, %v936
        %v947 = vcombine.high %v943, %v943
        %v949 = vunpack.c.l.s4 1966171168
        %v950 = vunpack.c.0.s8 %v949
        %v951 = vlaneseq
        %v952 = vshrl.u32 %v951, 7
        %v953 = vsub.s32 %v950, %v952
        %v954 = vrot.slane %v896, %v953
        %v956 = vunpack.c.l.s4 1966171168
        %v957 = vunpack.c.0.s8 %v956
        %v958 = vlaneseq
        %v959 = vshrl.u32 %v958, 7
        %v960 = vsub.s32 %v957, %v959
        %v961 = vrot.slane %v954, %v960
        %v962 = vunpack.i.l.s16 %v922
        %v963 = vunpack.i.h.s16 %v922
        %v964 = vunpack.i.l.s16 %v936
        %v965 = vunpack.i.h.s16 %v936
        %v966 = vunpack.i.l.s16 %v944
        %v967 = vunpack.i.h.s16 %v944
        %v968 = vunpack.i.l.s16 %v946
        %v969 = vunpack.i.h.s16 %v946
        %v970 = vunpack.i.l.s16 %v929
        %v971 = vunpack.i.h.s16 %v929
        %v972 = vunpack.i.l.s16 %v943
        %v973 = vunpack.i.h.s16 %v943
        %v974 = vunpack.i.l.s16 %v945
        %v975 = vunpack.i.h.s16 %v945
        %v976 = vunpack.i.l.s16 %v947
        %v977 = vunpack.i.h.s16 %v947
        %v978 = vunpack.i.l.s16 %v961
        %v979 = vunpack.i.h.s16 %v961
        %v980 = vpack.i.b16 %v963, %v962
        %v981 = vpack.i.b16 %v965, %v964
        %v982 = vpack.i.b16 %v967, %v966
        %v984 = vpack.i.b16 %v972, %v971
        %v985 = vpack.i.b16 %v974, %v973
        %v986 = vpack.i.b16 %v976, %v975
        %v988 = vcombine.low %v980, %v981
        %v989 = vcombine.low %v982, %v968
        %v991 = vunpack.c.l.s4 1966171168
        %v992 = vunpack.c.0.s8 %v991
        %v993 = vlaneseq
        %v994 = vshrl.u32 %v993, 7
        %v995 = vsub.s32 %v992, %v994
        %v996 = vrot.slane %v988, %v995
        %v998 = vunpack.c.l.s4 1966171168
        %v999 = vunpack.c.0.s8 %v998
        %v1000 = vlaneseq
        %v1001 = vshrl.u32 %v1000, 7
        %v1002 = vsub.s32 %v999, %v1001
        %v1003 = vrot.slane %v989, %v1002
        %v1004 = vcombine.low %v996, %v1003
        %v1006 = vunpack.c.l.s4 1966171168
        %v1007 = vunpack.c.0.s8 %v1006
        %v1008 = vlaneseq
        %v1009 = vshrl.u32 %v1008, 7
        %v1010 = vsub.s32 %v1007, %v1009
        %v1011 = vrot.slane %v1004, %v1010
        %v1012 = vcombine.low %v984, %v985
        %v1013 = vcombine.low %v986, %v977
        %v1015 = vunpack.c.l.s4 1966171168
        %v1016 = vunpack.c.0.s8 %v1015
        %v1017 = vlaneseq
        %v1018 = vshrl.u32 %v1017, 7
        %v1019 = vsub.s32 %v1016, %v1018
        %v1020 = vrot.slane %v1012, %v1019
        %v1022 = vunpack.c.l.s4 1966171168
        %v1023 = vunpack.c.0.s8 %v1022
        %v1024 = vlaneseq
        %v1025 = vshrl.u32 %v1024, 7
        %v1026 = vsub.s32 %v1023, %v1025
        %v1027 = vrot.slane %v1013, %v1026
        %v1028 = vcombine.low %v1020, %v1027
        %v1030 = vunpack.c.l.s4 1966171168
        %v1031 = vunpack.c.0.s8 %v1030
        %v1032 = vlaneseq
        %v1033 = vshrl.u32 %v1032, 7
        %v1034 = vsub.s32 %v1031, %v1033
        %v1035 = vrot.slane %v1028, %v1034
        %v1036 = vpack.i.b16 %v964, %v963
        %v1037 = vpack.i.b16 %v966, %v965
        %v1038 = vpack.i.b16 %v968, %v967
        %v1040 = vpack.i.b16 %v973, %v972
        %v1041 = vpack.i.b16 %v975, %v974
        %v1042 = vpack.i.b16 %v977, %v976
        %v1044 = vcombine.low %v1036, %v1037
        %v1045 = vcombine.low %v1038, %v969
        %v1047 = vunpack.c.l.s4 1966171168
        %v1048 = vunpack.c.0.s8 %v1047
        %v1049 = vlaneseq
        %v1050 = vshrl.u32 %v1049, 7
        %v1051 = vsub.s32 %v1048, %v1050
        %v1052 = vrot.slane %v1044, %v1051
        %v1054 = vunpack.c.l.s4 1966171168
        %v1055 = vunpack.c.0.s8 %v1054
        %v1056 = vlaneseq
        %v1057 = vshrl.u32 %v1056, 7
        %v1058 = vsub.s32 %v1055, %v1057
        %v1059 = vrot.slane %v1045, %v1058
        %v1060 = vcombine.low %v1052, %v1059
        %v1062 = vunpack.c.l.s4 1966171168
        %v1063 = vunpack.c.0.s8 %v1062
        %v1064 = vlaneseq
        %v1065 = vshrl.u32 %v1064, 7
        %v1066 = vsub.s32 %v1063, %v1065
        %v1067 = vrot.slane %v1060, %v1066
        %v1068 = vcombine.low %v1040, %v1041
        %v1069 = vcombine.low %v1042, %v978
        %v1071 = vunpack.c.l.s4 1966171168
        %v1072 = vunpack.c.0.s8 %v1071
        %v1073 = vlaneseq
        %v1074 = vshrl.u32 %v1073, 7
        %v1075 = vsub.s32 %v1072, %v1074
        %v1076 = vrot.slane %v1068, %v1075
        %v1078 = vunpack.c.l.s4 1966171168
        %v1079 = vunpack.c.0.s8 %v1078
        %v1080 = vlaneseq
        %v1081 = vshrl.u32 %v1080, 7
        %v1082 = vsub.s32 %v1079, %v1081
        %v1083 = vrot.slane %v1069, %v1082
        %v1084 = vcombine.low %v1076, %v1083
        %v1086 = vunpack.c.l.s4 1966171168
        %v1087 = vunpack.c.0.s8 %v1086
        %v1088 = vlaneseq
        %v1089 = vshrl.u32 %v1088, 7
        %v1090 = vsub.s32 %v1087, %v1089
        %v1091 = vrot.slane %v1084, %v1090
        %1092 = vrot.lane.b32.xlu0 %v1067, 16
        %v1093 = vpop.permute.xlu0 %1092
        %1094 = vrot.lane.b32.xlu0 %v1091, 16
        %v1095 = vpop.permute.xlu0 %1094
        %v1096 = vpack.i.b16 %v969, %v968
        %v1098 = vpack.i.b16 %v978, %v977
        %v1100 = vcombine.low %v981, %v982
        %v1101 = vcombine.low %v1096, %v970
        %v1103 = vunpack.c.l.s4 1966171168
        %v1104 = vunpack.c.0.s8 %v1103
        %v1105 = vlaneseq
        %v1106 = vshrl.u32 %v1105, 7
        %v1107 = vsub.s32 %v1104, %v1106
        %v1108 = vrot.slane %v1100, %v1107
        %v1110 = vunpack.c.l.s4 1966171168
        %v1111 = vunpack.c.0.s8 %v1110
        %v1112 = vlaneseq
        %v1113 = vshrl.u32 %v1112, 7
        %v1114 = vsub.s32 %v1111, %v1113
        %v1115 = vrot.slane %v1101, %v1114
        %v1116 = vcombine.low %v1108, %v1115
        %v1118 = vunpack.c.l.s4 1966171168
        %v1119 = vunpack.c.0.s8 %v1118
        %v1120 = vlaneseq
        %v1121 = vshrl.u32 %v1120, 7
        %v1122 = vsub.s32 %v1119, %v1121
        %v1123 = vrot.slane %v1116, %v1122
        %v1124 = vcombine.low %v985, %v986
        %v1125 = vcombine.low %v1098, %v979
        %v1127 = vunpack.c.l.s4 1966171168
        %v1128 = vunpack.c.0.s8 %v1127
        %v1129 = vlaneseq
        %v1130 = vshrl.u32 %v1129, 7
        %v1131 = vsub.s32 %v1128, %v1130
        %v1132 = vrot.slane %v1124, %v1131
        %v1134 = vunpack.c.l.s4 1966171168
        %v1135 = vunpack.c.0.s8 %v1134
        %v1136 = vlaneseq
        %v1137 = vshrl.u32 %v1136, 7
        %v1138 = vsub.s32 %v1135, %v1137
        %v1139 = vrot.slane %v1125, %v1138
        %v1140 = vcombine.low %v1132, %v1139
        %v1142 = vunpack.c.l.s4 1966171168
        %v1143 = vunpack.c.0.s8 %v1142
        %v1144 = vlaneseq
        %v1145 = vshrl.u32 %v1144, 7
        %v1146 = vsub.s32 %v1143, %v1145
        %v1147 = vrot.slane %v1140, %v1146
        %1148 = vrot.lane.b32.xlu0 %v1123, 32
        %v1149 = vpop.permute.xlu0 %1148
        %1150 = vrot.lane.b32.xlu0 %v1147, 32
        %v1151 = vpop.permute.xlu0 %1150
        %v1154 = vsel %vm645, %v1011, %v1093
        %v1157 = vsel %vm645, %v1035, %v1095
        %v1159 = vsel %vm552, %v1154, %v1149
        %v1161 = vsel %vm552, %v1157, %v1151
        %v1165 = vunpack.c.l.s4 1966171168
        %v1166 = vunpack.c.0.s8 %v1165
        %v1167 = vlaneseq
        %v1168 = vshrl.u32 %v1167, 7
        %v1169 = vsub.s32 %v1166, %v1168
        %v1170 = vrot.slane %v1159, %v1169
        %v1171 = vcombine.high %v1170, %v1170
        %v1173 = vunpack.c.l.s4 1966171168
        %v1174 = vunpack.c.0.s8 %v1173
        %v1175 = vlaneseq
        %v1176 = vshrl.u32 %v1175, 7
        %v1177 = vsub.s32 %v1174, %v1176
        %v1178 = vrot.slane %v1170, %v1177
        %v1180 = vunpack.c.l.s4 1966171168
        %v1181 = vunpack.c.0.s8 %v1180
        %v1182 = vlaneseq
        %v1183 = vshrl.u32 %v1182, 7
        %v1184 = vsub.s32 %v1181, %v1183
        %v1185 = vrot.slane %v1171, %v1184
        %v1186 = vcombine.high %v1178, %v1178
        %v1187 = vcombine.high %v1185, %v1185
        %v1189 = vunpack.c.l.s4 1966171168
        %v1190 = vunpack.c.0.s8 %v1189
        %v1191 = vlaneseq
        %v1192 = vshrl.u32 %v1191, 7
        %v1193 = vsub.s32 %v1190, %v1192
        %v1194 = vrot.slane %v1161, %v1193
        %v1195 = vcombine.high %v1194, %v1194
        %v1197 = vunpack.c.l.s4 1966171168
        %v1198 = vunpack.c.0.s8 %v1197
        %v1199 = vlaneseq
        %v1200 = vshrl.u32 %v1199, 7
        %v1201 = vsub.s32 %v1198, %v1200
        %v1202 = vrot.slane %v1194, %v1201
        %v1204 = vunpack.c.l.s4 1966171168
        %v1205 = vunpack.c.0.s8 %v1204
        %v1206 = vlaneseq
        %v1207 = vshrl.u32 %v1206, 7
        %v1208 = vsub.s32 %v1205, %v1207
        %v1209 = vrot.slane %v1195, %v1208
        %v1210 = vcombine.high %v1202, %v1202
        %v1211 = vcombine.high %v1209, %v1209
        %v1212 = vunpack.i.l.s16 %v1178
        %v1213 = vunpack.i.h.s16 %v1178
        %v1214 = vunpack.i.l.s16 %v1185
        %v1215 = vunpack.i.h.s16 %v1185
        %v1216 = vunpack.i.l.s16 %v1186
        %v1217 = vunpack.i.h.s16 %v1186
        %v1218 = vunpack.i.l.s16 %v1187
        %v1219 = vunpack.i.l.s16 %v1202
        %v1220 = vunpack.i.h.s16 %v1202
        %v1221 = vunpack.i.l.s16 %v1209
        %v1222 = vunpack.i.h.s16 %v1209
        %v1223 = vunpack.i.l.s16 %v1210
        %v1224 = vunpack.i.h.s16 %v1210
        %v1225 = vunpack.i.l.s16 %v1211
        %v1226 = vld [vmem:[%s434] sm:$0xf]
        %v1227 = vld [vmem:[%s434 + $0x4] sm:$0xf]
        %v1228 = vld [vmem:[%s434 + $0x8] sm:$0xf]
        %v1229 = vld [vmem:[%s434 + $0xc] sm:$0xf]
        %v1230 = vld [vmem:[%s434 + $0x10] sm:$0xf]
        %v1231 = vld [vmem:[%s434 + $0x14] sm:$0xf]
        %v1232 = vpack.i.b16 %v1213, %v1212
        %v1233 = vpack.i.b16 %v1215, %v1214
        %v1234 = vpack.i.b16 %v1217, %v1216
        %v1235 = vpack.i.b16 %v1219, %v1218
        %v1236 = vpack.i.b16 %v1221, %v1220
        %v1237 = vpack.i.b16 %v1223, %v1222
        %v1238 = vpack.i.b16 %v1225, %v1224
        %v1239 = vcombine.low %v1232, %v1233
        %v1240 = vcombine.low %v1234, %v1235
        %v1241 = vcombine.low %v1236, %v1237
        %v1243 = vunpack.c.l.s4 1966171168
        %v1244 = vunpack.c.0.s8 %v1243
        %v1245 = vlaneseq
        %v1246 = vshrl.u32 %v1245, 7
        %v1247 = vsub.s32 %v1244, %v1246
        %v1248 = vrot.slane %v1239, %v1247
        %v1250 = vunpack.c.l.s4 1966171168
        %v1251 = vunpack.c.0.s8 %v1250
        %v1252 = vlaneseq
        %v1253 = vshrl.u32 %v1252, 7
        %v1254 = vsub.s32 %v1251, %v1253
        %v1255 = vrot.slane %v1240, %v1254
        %v1257 = vunpack.c.l.s4 1966171168
        %v1258 = vunpack.c.0.s8 %v1257
        %v1259 = vlaneseq
        %v1260 = vshrl.u32 %v1259, 7
        %v1261 = vsub.s32 %v1258, %v1260
        %v1262 = vrot.slane %v1241, %v1261
        %v1264 = vunpack.c.l.s4 1966171168
        %v1265 = vunpack.c.0.s8 %v1264
        %v1266 = vlaneseq
        %v1267 = vshrl.u32 %v1266, 7
        %v1268 = vsub.s32 %v1265, %v1267
        %v1269 = vrot.slane %v1238, %v1268
        %v1270 = vcombine.low %v1248, %v1255
        %v1271 = vcombine.low %v1262, %v1269
        %v1273 = vunpack.c.l.s4 1966171168
        %v1274 = vunpack.c.0.s8 %v1273
        %v1275 = vlaneseq
        %v1276 = vshrl.u32 %v1275, 7
        %v1277 = vsub.s32 %v1274, %v1276
        %v1278 = vrot.slane %v1270, %v1277
        %v1280 = vunpack.c.l.s4 1966171168
        %v1281 = vunpack.c.0.s8 %v1280
        %v1282 = vlaneseq
        %v1283 = vshrl.u32 %v1282, 7
        %v1284 = vsub.s32 %v1281, %v1283
        %v1285 = vrot.slane %v1271, %v1284
        %v1286 = vcombine.low %v1278, %v1285
        %v1293 = vunpack.c.l.b16 %v1226
        %v1294 = vunpack.c.l.b16 %v1227
        %v1295 = vunpack.c.l.b16 %v1228
        %v1296 = vunpack.c.l.b16 %v1229
        %v1297 = vunpack.c.l.b16 %v1230
        %v1298 = vunpack.c.l.b16 %v1231
        %v1299 = vpack.c.b16 %v1294, %v1293
        %v1300 = vpack.c.b16 %v1296, %v1295
        %v1301 = vpack.c.b16 %v1298, %v1297
        %v1306 = vsel %vm648, %v1286, 0
        %1308 = vmatprep.subr.bf16.mxu0 0
        %1309 = vmatpush1.bf16.msra.mxu0 %v1299
        %1310 = vmatprep.subr.bf16.mxu0 0
        %1311 = vmatpush1.bf16.msra.mxu0 %v1300
        %1312 = vmatprep.subr.bf16.mxu0 0
        %1313 = vmatpush1.bf16.msra.mxu0 %v1301
        %1314 = vmatprep.subr.bf16.mxu0 0
        %1315 = vmatpush1.bf16.msra.mxu0 0
        %1316 = vmatprep.subr.bf16.mxu0 0
        %1317 = vmatpush1.bf16.msra.mxu0 0
        %1318 = vmatprep.subr.bf16.mxu0 0
        %1319 = vmatpush1.bf16.msra.mxu0 0
        %1320 = vmatprep.subr.bf16.mxu0 0
        %1321 = vmatpush1.bf16.msra.mxu0 0
        %1322 = vmatprep.subr.bf16.mxu0 0
        %1323 = vmatpush1.bf16.msra.mxu0 0
        %1324 = vmatprep.subr.bf16.mxu0 0
        %1325 = vmatpush1.bf16.msra.mxu0 0
        %1326 = vmatprep.subr.bf16.mxu0 0
        %1327 = vmatpush1.bf16.msra.mxu0 0
        %1328 = vmatprep.subr.bf16.mxu0 0
        %1329 = vmatpush1.bf16.msra.mxu0 0
        %1330 = vmatprep.subr.bf16.mxu0 0
        %1331 = vmatpush1.bf16.msra.mxu0 0
        %1332 = vmatprep.subr.bf16.mxu0 0
        %1333 = vmatpush1.bf16.msra.mxu0 0
        %1334 = vmatprep.subr.bf16.mxu0 0
        %1335 = vmatpush1.bf16.msra.mxu0 0
        %1336 = vmatprep.subr.bf16.mxu0 0
        %1337 = vmatpush1.bf16.msra.mxu0 0
        %1338 = vmatprep.subr.bf16.mxu0 0
        %1339 = vmatpush1.bf16.msra.mxu0 0
        %1340 = vmatprep.mubr.bf16.mxu0 0
        %1341 = vmatmul.mubr.bf16.gmra.mrb[0].mxu0 %v1306
        %v1342 = vpop.f32.mrb[0].mxu0
        %v1343 = vadd.f32 0.0, %v1342
        %v1344 = vpop.f32.mrb[0].mxu0
        %v1345 = vpop.f32.mrb[0].mxu0
        %v1346 = vadd.f32 0.0, %v1345
        %v1347 = vpop.f32.mrb[0].mxu0
        %1348 = vdwg.mxu0
        %v1349 = vsel %vm645, %v1343, 0.0
        %vm1350 = vcmask 128000
        %v1351 = vsel %vm1350, %v1346, 0.0
        %v1352 = vadd.f32 %v1349, %v1351
        %v1353 = vrot.slane %v1352, 4
        %v1354 = vadd.f32 %v1352, %v1353
        %v1355 = vrot.slane %v1354, 2
        %v1356 = vadd.f32 %v1354, %v1355
        %v1357 = vrot.slane %v1356, 1
        %v1358 = vadd.f32 %v1356, %v1357
        %v1359 = vrcp.pop 14.0
        %v1360 = vmul.f32 %v1358, %v1359
        %v1361 = vsub.f32 %v1343, %v1360
        %v1362 = vsub.f32 %v1346, %v1360
        %v1363 = vmul.f32 %v1361, %v1361
        %v1364 = vmul.f32 %v1362, %v1362
        %v1365 = vsel %vm645, %v1363, 0.0
        %v1366 = vsel %vm1350, %v1364, 0.0
        %v1367 = vadd.f32 %v1365, %v1366
        %v1368 = vrot.slane %v1367, 4
        %v1369 = vadd.f32 %v1367, %v1368
        %v1370 = vrot.slane %v1369, 2
        %v1371 = vadd.f32 %v1369, %v1370
        %v1372 = vrot.slane %v1371, 1
        %v1373 = vadd.f32 %v1371, %v1372
        %v1374 = vmul.f32 %v1373, %v1359
        %v1375 = vadd.f32 %v1374, 1e-05
        %v1376 = vrsqrt.pop %v1375
        %v1377 = vmul.f32 %v524, %v1376
        %v1378 = vlaneseq
        %v1379 = vshrl.u32 %v1378, 7
        %v1380 = vsub.s32 0, %v1379
        %v1381 = vrot.slane %v1377, %v1380
        %v1382 = vmul.f32 %v1361, %v1381
        %v1383 = vmul.f32 %v1362, %v1381
        %v1384 = vlaneseq
        %v1385 = vshrl.u32 %v1384, 7
        %v1386 = vsub.s32 1, %v1385
        %v1387 = vrot.slane %v524, %v1386
        %v1388 = vadd.f32 %v1382, %v1387
        %v1389 = vadd.f32 %v1383, %v1387
        %v1390 = vmul.f32 %v1388, 0.5
        %v1391 = vmul.f32 %v1389, 0.5
        %v1392 = vmul.f32 %v1388, 0.70710677
        %v1393 = vmul.f32 %v1389, 0.70710677
        %v1394 = verf.f32.pop %v1392
        %v1395 = verf.f32.pop %v1393
        %v1396 = vadd.f32 %v1394, 1.0
        %v1397 = vadd.f32 %v1395, 1.0
        %v1398 = vmul.f32 %v1390, %v1396
        %v1399 = vmul.f32 %v1391, %v1397
        %v1402 = vcombine.high %v1398, %v1398
        %v1404 = vunpack.c.l.s4 1966171168
        %v1405 = vunpack.c.0.s8 %v1404
        %v1406 = vlaneseq
        %v1407 = vshrl.u32 %v1406, 7
        %v1408 = vsub.s32 %v1405, %v1407
        %v1409 = vrot.slane %v1398, %v1408
        %v1411 = vunpack.c.l.s4 1966171168
        %v1412 = vunpack.c.0.s8 %v1411
        %v1413 = vlaneseq
        %v1414 = vshrl.u32 %v1413, 7
        %v1415 = vsub.s32 %v1412, %v1414
        %v1416 = vrot.slane %v1402, %v1415
        %v1417 = vcombine.high %v1409, %v1409
        %v1418 = vcombine.high %v1416, %v1416
        %v1420 = vunpack.c.l.s4 1966171168
        %v1421 = vunpack.c.0.s8 %v1420
        %v1422 = vlaneseq
        %v1423 = vshrl.u32 %v1422, 7
        %v1424 = vsub.s32 %v1421, %v1423
        %v1425 = vrot.slane %v1409, %v1424
        %v1427 = vunpack.c.l.s4 1966171168
        %v1428 = vunpack.c.0.s8 %v1427
        %v1429 = vlaneseq
        %v1430 = vshrl.u32 %v1429, 7
        %v1431 = vsub.s32 %v1428, %v1430
        %v1432 = vrot.slane %v1416, %v1431
        %v1434 = vunpack.c.l.s4 1966171168
        %v1435 = vunpack.c.0.s8 %v1434
        %v1436 = vlaneseq
        %v1437 = vshrl.u32 %v1436, 7
        %v1438 = vsub.s32 %v1435, %v1437
        %v1439 = vrot.slane %v1417, %v1438
        %v1441 = vunpack.c.l.s4 1966171168
        %v1442 = vunpack.c.0.s8 %v1441
        %v1443 = vlaneseq
        %v1444 = vshrl.u32 %v1443, 7
        %v1445 = vsub.s32 %v1442, %v1444
        %v1446 = vrot.slane %v1418, %v1445
        %v1447 = vcombine.high %v1425, %v1425
        %v1448 = vcombine.high %v1432, %v1432
        %v1449 = vcombine.high %v1439, %v1439
        %v1450 = vcombine.high %v1446, %v1446
        %v1451 = vcombine.high %v1399, %v1399
        %v1453 = vunpack.c.l.s4 1966171168
        %v1454 = vunpack.c.0.s8 %v1453
        %v1455 = vlaneseq
        %v1456 = vshrl.u32 %v1455, 7
        %v1457 = vsub.s32 %v1454, %v1456
        %v1458 = vrot.slane %v1399, %v1457
        %v1460 = vunpack.c.l.s4 1966171168
        %v1461 = vunpack.c.0.s8 %v1460
        %v1462 = vlaneseq
        %v1463 = vshrl.u32 %v1462, 7
        %v1464 = vsub.s32 %v1461, %v1463
        %v1465 = vrot.slane %v1451, %v1464
        %v1466 = vcombine.high %v1458, %v1458
        %v1467 = vcombine.high %v1465, %v1465
        %v1469 = vunpack.c.l.s4 1966171168
        %v1470 = vunpack.c.0.s8 %v1469
        %v1471 = vlaneseq
        %v1472 = vshrl.u32 %v1471, 7
        %v1473 = vsub.s32 %v1470, %v1472
        %v1474 = vrot.slane %v1458, %v1473
        %v1476 = vunpack.c.l.s4 1966171168
        %v1477 = vunpack.c.0.s8 %v1476
        %v1478 = vlaneseq
        %v1479 = vshrl.u32 %v1478, 7
        %v1480 = vsub.s32 %v1477, %v1479
        %v1481 = vrot.slane %v1465, %v1480
        %v1483 = vunpack.c.l.s4 1966171168
        %v1484 = vunpack.c.0.s8 %v1483
        %v1485 = vlaneseq
        %v1486 = vshrl.u32 %v1485, 7
        %v1487 = vsub.s32 %v1484, %v1486
        %v1488 = vrot.slane %v1466, %v1487
        %v1490 = vunpack.c.l.s4 1966171168
        %v1491 = vunpack.c.0.s8 %v1490
        %v1492 = vlaneseq
        %v1493 = vshrl.u32 %v1492, 7
        %v1494 = vsub.s32 %v1491, %v1493
        %v1495 = vrot.slane %v1467, %v1494
        %v1496 = vcombine.high %v1474, %v1474
        %v1497 = vcombine.high %v1488, %v1488
        %v1498 = vcombine.low %v1425, %v1439
        %v1499 = vcombine.low %v1447, %v1449
        %v1500 = vcombine.low %v1432, %v1446
        %v1502 = vunpack.c.l.s4 1966171168
        %v1503 = vunpack.c.0.s8 %v1502
        %v1504 = vlaneseq
        %v1505 = vshrl.u32 %v1504, 7
        %v1506 = vsub.s32 %v1503, %v1505
        %v1507 = vrot.slane %v1498, %v1506
        %v1509 = vunpack.c.l.s4 1966171168
        %v1510 = vunpack.c.0.s8 %v1509
        %v1511 = vlaneseq
        %v1512 = vshrl.u32 %v1511, 7
        %v1513 = vsub.s32 %v1510, %v1512
        %v1514 = vrot.slane %v1499, %v1513
        %v1516 = vunpack.c.l.s4 1966171168
        %v1517 = vunpack.c.0.s8 %v1516
        %v1518 = vlaneseq
        %v1519 = vshrl.u32 %v1518, 7
        %v1520 = vsub.s32 %v1517, %v1519
        %v1521 = vrot.slane %v1500, %v1520
        %v1523 = vunpack.c.l.s4 1966171168
        %v1524 = vunpack.c.0.s8 %v1523
        %v1525 = vlaneseq
        %v1526 = vshrl.u32 %v1525, 7
        %v1527 = vsub.s32 %v1524, %v1526
        %v1528 = vrot.slane %v1448, %v1527
        %v1529 = vcombine.low %v1507, %v1514
        %v1530 = vcombine.low %v1521, %v1528
        %v1532 = vunpack.c.l.s4 1966171168
        %v1533 = vunpack.c.0.s8 %v1532
        %v1534 = vlaneseq
        %v1535 = vshrl.u32 %v1534, 7
        %v1536 = vsub.s32 %v1533, %v1535
        %v1537 = vrot.slane %v1529, %v1536
        %v1539 = vunpack.c.l.s4 1966171168
        %v1540 = vunpack.c.0.s8 %v1539
        %v1541 = vlaneseq
        %v1542 = vshrl.u32 %v1541, 7
        %v1543 = vsub.s32 %v1540, %v1542
        %v1544 = vrot.slane %v1530, %v1543
        %v1545 = vcombine.low %v1537, %v1544
        %v1546 = vcombine.low %v1450, %v1474
        %v1547 = vcombine.low %v1488, %v1496
        %v1548 = vcombine.low %v1497, %v1481
        %v1550 = vunpack.c.l.s4 1966171168
        %v1551 = vunpack.c.0.s8 %v1550
        %v1552 = vlaneseq
        %v1553 = vshrl.u32 %v1552, 7
        %v1554 = vsub.s32 %v1551, %v1553
        %v1555 = vrot.slane %v1546, %v1554
        %v1557 = vunpack.c.l.s4 1966171168
        %v1558 = vunpack.c.0.s8 %v1557
        %v1559 = vlaneseq
        %v1560 = vshrl.u32 %v1559, 7
        %v1561 = vsub.s32 %v1558, %v1560
        %v1562 = vrot.slane %v1547, %v1561
        %v1564 = vunpack.c.l.s4 1966171168
        %v1565 = vunpack.c.0.s8 %v1564
        %v1566 = vlaneseq
        %v1567 = vshrl.u32 %v1566, 7
        %v1568 = vsub.s32 %v1565, %v1567
        %v1569 = vrot.slane %v1548, %v1568
        %v1571 = vunpack.c.l.s4 1966171168
        %v1572 = vunpack.c.0.s8 %v1571
        %v1573 = vlaneseq
        %v1574 = vshrl.u32 %v1573, 7
        %v1575 = vsub.s32 %v1572, %v1574
        %v1576 = vrot.slane %v1495, %v1575
        %v1577 = vcombine.low %v1555, %v1562
        %v1578 = vcombine.low %v1569, %v1576
        %v1580 = vunpack.c.l.s4 1966171168
        %v1581 = vunpack.c.0.s8 %v1580
        %v1582 = vlaneseq
        %v1583 = vshrl.u32 %v1582, 7
        %v1584 = vsub.s32 %v1581, %v1583
        %v1585 = vrot.slane %v1577, %v1584
        %v1587 = vunpack.c.l.s4 1966171168
        %v1588 = vunpack.c.0.s8 %v1587
        %v1589 = vlaneseq
        %v1590 = vshrl.u32 %v1589, 7
        %v1591 = vsub.s32 %v1588, %v1590
        %v1592 = vrot.slane %v1578, %v1591
        %v1593 = vcombine.low %v1585, %v1592
        %vm1596 = vcmask 129024
        %v1597 = vsel %vm1596, %v1545, 0.0
        %v1598 = vrot.slane %v1597, 4
        %v1599 = vadd.f32 %v1597, %v1598
        %v1600 = vrot.slane %v1599, 2
        %v1601 = vadd.f32 %v1599, %v1600
        %v1602 = vrot.slane %v1601, 1
        %v1603 = vadd.f32 %v1601, %v1602
        %v1604 = vsel %vm1596, %v1593, 0.0
        %v1605 = vrot.slane %v1604, 4
        %v1606 = vadd.f32 %v1604, %v1605
        %v1607 = vrot.slane %v1606, 2
        %v1608 = vadd.f32 %v1606, %v1607
        %v1609 = vrot.slane %v1608, 1
        %v1610 = vadd.f32 %v1608, %v1609
        %v1611 = vrcp.pop 7.0
        %v1612 = vmul.f32 %v1603, %v1611
        %v1613 = vmul.f32 %v1610, %v1611
        %v1614 = vpack.c.bf16 %v1612, %v1612
        %v1615 = vpack.c.bf16 %v1613, %v1613
        %v1616 = vld [vmem:[%s461] sm:$0xf]
        %v1617 = vld [vmem:[%s461 + $0x4] sm:$0xf]
        %v1620 = vunpack.c.l.b16 %v1614
        %v1621 = vunpack.c.l.b16 %v1615
        %vm1622 = vcmask 1041409
        %v1623 = vsel %vm1622, %v1621, %v1620
        %v1624 = vpack.c.b16 %v1623, %v1623
        %v1627 = vunpack.c.l.b16 %v1616
        %v1628 = vunpack.c.l.b16 %v1617
        %v1629 = vpack.c.b16 %v1628, %v1627
        %v1632 = vsel %vm645, %v1624, 0
        %1634 = vmatprep.subr.bf16.mxu0 0
        %1635 = vmatpush1.bf16.msra.mxu0 %v1629
        %1636 = vmatprep.subr.bf16.mxu0 0
        %1637 = vmatpush1.bf16.msra.mxu0 0
        %1638 = vmatprep.subr.bf16.mxu0 0
        %1639 = vmatpush1.bf16.msra.mxu0 0
        %1640 = vmatprep.subr.bf16.mxu0 0
        %1641 = vmatpush1.bf16.msra.mxu0 0
        %1642 = vmatprep.subr.bf16.mxu0 0
        %1643 = vmatpush1.bf16.msra.mxu0 0
        %1644 = vmatprep.subr.bf16.mxu0 0
        %1645 = vmatpush1.bf16.msra.mxu0 0
        %1646 = vmatprep.subr.bf16.mxu0 0
        %1647 = vmatpush1.bf16.msra.mxu0 0
        %1648 = vmatprep.subr.bf16.mxu0 0
        %1649 = vmatpush1.bf16.msra.mxu0 0
        %1650 = vmatprep.subr.bf16.mxu0 0
        %1651 = vmatpush1.bf16.msra.mxu0 0
        %1652 = vmatprep.subr.bf16.mxu0 0
        %1653 = vmatpush1.bf16.msra.mxu0 0
        %1654 = vmatprep.subr.bf16.mxu0 0
        %1655 = vmatpush1.bf16.msra.mxu0 0
        %1656 = vmatprep.subr.bf16.mxu0 0
        %1657 = vmatpush1.bf16.msra.mxu0 0
        %1658 = vmatprep.subr.bf16.mxu0 0
        %1659 = vmatpush1.bf16.msra.mxu0 0
        %1660 = vmatprep.subr.bf16.mxu0 0
        %1661 = vmatpush1.bf16.msra.mxu0 0
        %1662 = vmatprep.subr.bf16.mxu0 0
        %1663 = vmatpush1.bf16.msra.mxu0 0
        %1664 = vmatprep.subr.bf16.mxu0 0
        %1665 = vmatpush1.bf16.msra.mxu0 0
        %1666 = vmatprep.mubr.bf16.mxu0 0
        %1667 = vmatmul.mubr.bf16.gmra.mrb[0].mxu0 %v1632
        %v1668 = vpop.f32.mrb[0].mxu0
        %v1669 = vadd.f32 0.0, %v1668
        %v1670 = vpop.f32.mrb[0].mxu0
        %v1671 = vpop.f32.mrb[0].mxu0
        %v1672 = vpop.f32.mrb[0].mxu0
        %1673 = vdwg.mxu0
        %vm1674 = vcmask 33792
        %1675 = vst.msk [vmem:[%s521] sm:$0x3] %vm1674, %v1669
        %s1676 = sand.u32 %s223, 1
        %s1677 = scalar_lea.sflag [#allocation4], %s1676
        %s1678 = sand.u32 %s223, 1
        %s1679 = smul.addr %s1678, 2
        %s1680 = scalar_lea.vmem [#allocation14], %s1679
        // Predicated region
        $region77: #{series2vec_forward.1} parent=47 // pred_check
          %p1681 = pneg %p233
        $region78: #{series2vec_forward.1} parent=47 // pred_check_branch
          %1683 = sbr.rel (%p1681) target = $region80
        $region79: #{series2vec_forward.1} parent=47 // pred_region
          %s1685 = ssub.s32 32, 32
          %1686 = vsyncadd %s1677, %s1685
          %s1687 = smul.addr %s33, 32
          %s1688 = scalar_lea.hbm %s7, %s1687
          %s1690 = sshll.u32 %s1680, 4
          %s1691 = int_to_ptr.vmem [resolvable:$true] %s1690
          %1693 = dma.vmem_to_hbm [thread:$0]  %s1691, 32, %s1688, %s1677
        $region80: #{series2vec_forward.1} parent=47 // pred_fallthru
          _
      $region48: #{series2vec_forward.1} parent=5 // pred_fallthru
        _
      %p1694 = scmp.le.s32.totalorder 2, %s28
      // Predicated region
      $region81: #{series2vec_forward.1} parent=5 // pred_check
        %p1695 = pneg %p1694
      $region82: #{series2vec_forward.1} parent=5 // pred_check_branch
        %1697 = sbr.rel (%p1695) target = $region84
      $region83: #{series2vec_forward.1} parent=5 // pred_region
        %s1698 = ssub.s32 %s28, 2
        // Predicated region
        $region85: #{series2vec_forward.1} parent=83 // pred_check
          %p1699 = pneg %p239
        $region86: #{series2vec_forward.1} parent=83 // pred_check_branch
          %1701 = sbr.rel (%p1699) target = $region88
        $region87: #{series2vec_forward.1} parent=83 // pred_region
          %s1702 = sand.u32 %s224, 1
          %s1703 = scalar_lea.sflag [#allocation4], %s1702
          %s1704 = sand.u32 %s224, 1
          %s1705 = smul.addr %s1704, 2
          %s1706 = scalar_lea.vmem [#allocation14], %s1705
          %1707 = dma.done %s1703, 32
        $region88: #{series2vec_forward.1} parent=83 // pred_fallthru
          _
      $region84: #{series2vec_forward.1} parent=5 // pred_fallthru
        _
    $region6: #{series2vec_forward.1} parent=1 // loop_footer
      %s32 = sadd.s32 1, %s28
    $region7: #{series2vec_forward.1} parent=1 // loop_footer_branch
      %27 = sbr.rel target = $region3
    $region8: #{series2vec_forward.1} parent=1 // loop_exit
      _
    %1708 = vsyncpa [#allocation3], 1
    %s1709 = scalar_lea.sflag [#allocation3], 1
    %1710 = vsyncpa %s1709, 1
    %1711 = vsyncpa [#allocation6], 1
    %s1712 = scalar_lea.sflag [#allocation6], 1
    %1713 = vsyncpa %s1712, 1
    %1714 = vsyncpa [#allocation9], 1
    %s1715 = scalar_lea.sflag [#allocation9], 1
    %1716 = vsyncpa %s1715, 1
    %1717 = vsyncpa [#allocation12], 1
    %s1718 = scalar_lea.sflag [#allocation12], 1
    %1719 = vsyncpa %s1718, 1
    %1720 = vsyncpa [#allocation4], 1
    %s1721 = scalar_lea.sflag [#allocation4], 1
    %1722 = vsyncpa %s1721, 1

</llo_original>
